<compile_context>
chip_gen: v7x
topology: tpu7x:2x2x1
jax: 0.10.0
libtpu: 0.0.40
codegen_flags: <defaults>
</compile_context>

<pallas_src>
import functools

import jax
import jax.numpy as jnp
from jax.experimental import pallas as pl
from jax.experimental.pallas import tpu as pltpu


def _fused_sage_kernel(a_ref, x_ref, wl1_ref, wr1_ref, b1_ref,
                       wl2_ref, wr2_ref, b2_ref, o_ref,
                       p2_ref, r2_ref, *, tm):
    """phase 0: layer 1 + layer-2 projections into scratch; phase 1: aggregate + store."""
    phase = pl.program_id(0)
    i = pl.program_id(1)
    row0 = pl.multiple_of(i * tm, tm)

    @pl.when(phase == 0)
    def _():
        a = a_ref[...].astype(jnp.float32)                      # [tm, N] bf16 -> f32
        # Layer 1, aggregate-first (f_in <= dim here, so the NxN contraction is narrowest).
        agg1 = jnp.dot(a, x_ref[...], preferred_element_type=jnp.float32)      # [tm, f_in]
        h = (jnp.dot(agg1, wl1_ref[...], preferred_element_type=jnp.float32)
             + jnp.dot(x_ref[pl.ds(row0, tm), :], wr1_ref[...],
                       preferred_element_type=jnp.float32)
             + b1_ref[...])
        h = jnp.maximum(h, 0.0)                                                 # [tm, dim]
        # Layer-2 projections done up front (project-before-aggregate), kept in VMEM scratch.
        p2_ref[pl.ds(row0, tm), :] = jnp.dot(
            h, wl2_ref[...], preferred_element_type=jnp.float32)
        r2_ref[pl.ds(row0, tm), :] = (
            jnp.dot(h, wr2_ref[...], preferred_element_type=jnp.float32) + b2_ref[...])

    @pl.when(phase == 1)
    def _():
        a = a_ref[...].astype(jnp.float32)
        out = (jnp.dot(a, p2_ref[...], preferred_element_type=jnp.float32)
               + r2_ref[pl.ds(row0, tm), :])
        o_ref[...] = out.astype(o_ref.dtype)


def build_mean_adj(edge_index, num_nodes):
    """Dense row-normalized adjacency for mean aggregation (source_to_target flow)."""
    # TODO(synk): for large sparse graphs (N >> a few thousand) replace the dense adjacency
    # with a CSR/edge-list gather via PrefetchScalarGridSpec scalar prefetch.
    src, dst = edge_index[0], edge_index[1]
    a = jnp.zeros((num_nodes, num_nodes), jnp.float32).at[dst, src].add(1.0)
    deg = a.sum(axis=1, keepdims=True)
    return jnp.where(deg > 0, a / jnp.maximum(deg, 1.0), 0.0)


def init_sage_params(key, in_channels, out_channels, dim):
    """Deterministic glorot-uniform style init for both SAGEConv layers."""
    def glorot(k, fan_in, fan_out):
        limit = jnp.sqrt(6.0 / (fan_in + fan_out))
        return jax.random.uniform(k, (fan_in, fan_out), jnp.float32, -limit, limit)

    ks = jax.random.split(key, 4)
    return {
        "w_l1": glorot(ks[0], in_channels, dim),
        "w_r1": glorot(ks[1], in_channels, dim),
        "b1": jnp.zeros((1, dim), jnp.float32),
        "w_l2": glorot(ks[2], dim, out_channels),
        "w_r2": glorot(ks[3], dim, out_channels),
        "b2": jnp.zeros((1, out_channels), jnp.float32),
    }


def _round_up(x, m):
    return (x + m - 1) // m * m


def sagenet_forward(params, x, edge_index, *, row_tile=None):
    n, f_in = x.shape
    dim = params["w_l1"].shape[1]
    f_out = params["w_l2"].shape[1]

    # Adjacency is the dominant HBM stream -> bf16 (accumulation stays f32 in-kernel).
    adj = build_mean_adj(edge_index, n).astype(jnp.bfloat16)

    # Row-tile size: as large as reasonable (bounded by 2 * tm * N * 2B of streamed A + the
    # resident operands staying well under the scoped VMEM limit).
    if row_tile is None:
        row_tile = 512 if n >= 512 else (256 if n >= 256 else 128)

    # Pad node count so it tiles cleanly. Padded nodes have zero features and no edges, so
    # they cannot influence real rows; their output rows are sliced away below.
    n_pad = _round_up(n, row_tile)
    if n_pad != n:
        adj = jnp.pad(adj, ((0, n_pad - n), (0, n_pad - n)))
        x = jnp.pad(x, ((0, n_pad - n), (0, 0)))

    # Lane-dense output: pad out_channels up to a multiple of 128 (zero columns), slice later.
    fo_pad = _round_up(f_out, 128)
    wl2 = jnp.zeros((dim, fo_pad), jnp.float32).at[:, :f_out].set(params["w_l2"])
    wr2 = jnp.zeros((dim, fo_pad), jnp.float32).at[:, :f_out].set(params["w_r2"])
    b2 = jnp.zeros((1, fo_pad), jnp.float32).at[:, :f_out].set(params["b2"])

    n_tiles = n_pad // row_tile
    kernel = functools.partial(_fused_sage_kernel, tm=row_tile)

    out_full = pl.pallas_call(
        kernel,
        out_shape=jax.ShapeDtypeStruct((n_pad, fo_pad), jnp.float32),
        grid_spec=pltpu.PrefetchScalarGridSpec(
            num_scalar_prefetch=0,
            grid=(2, n_tiles),                                       # (phase, row tile)
            in_specs=[
                pl.BlockSpec((row_tile, n_pad), lambda p, i: (i, 0)),  # A row tile (bf16 stream)
                pl.BlockSpec((n_pad, f_in), lambda p, i: (0, 0)),      # full X, resident
                pl.BlockSpec((f_in, dim), lambda p, i: (0, 0)),        # W_l1
                pl.BlockSpec((f_in, dim), lambda p, i: (0, 0)),        # W_r1
                pl.BlockSpec((1, dim), lambda p, i: (0, 0)),           # b1
                pl.BlockSpec((dim, fo_pad), lambda p, i: (0, 0)),      # W_l2 (lane-padded)
                pl.BlockSpec((dim, fo_pad), lambda p, i: (0, 0)),      # W_r2 (lane-padded)
                pl.BlockSpec((1, fo_pad), lambda p, i: (0, 0)),        # b2  (lane-padded)
            ],
            # (p*i, 0): block 0 stays resident through phase 0, so no output block is revisited.
            out_specs=pl.BlockSpec((row_tile, fo_pad), lambda p, i: (p * i, 0)),
            scratch_shapes=[
                pltpu.VMEM((n_pad, fo_pad), jnp.float32),  # p2 = h @ W_l2 (all nodes)
                pltpu.VMEM((n_pad, fo_pad), jnp.float32),  # r2 = h @ W_r2 + b2 (all nodes)
            ],
        ),
        compiler_params=pltpu.CompilerParams(
            # Scratch carries a cross-row-tile dependency (phase 1 reads every phase-0 tile),
            # so neither grid axis may be parallel.
            dimension_semantics=("arbitrary", "arbitrary"),
            vmem_limit_bytes=64 * 1024 * 1024,
        ),
    )(adj, x, params["w_l1"], params["w_r1"], params["b1"], wl2, wr2, b2)

    return out_full[:n, :f_out]


def sagenet_reference(params, x, edge_index):
    """Plain-JAX reference (same bf16 adjacency representation as the kernel)."""
    n = x.shape[0]
    adj = build_mean_adj(edge_index, n).astype(jnp.bfloat16).astype(jnp.float32)
    h = adj @ x @ params["w_l1"] + x @ params["w_r1"] + params["b1"]
    h = jnp.maximum(h, 0.0)
    return adj @ (h @ params["w_l2"]) + h @ params["w_r2"] + params["b2"]


if __name__ == "__main__":
    key = jax.random.PRNGKey(0)
    k_x, k_e, k_p = jax.random.split(key, 3)

    num_nodes = 256
    in_channels = 16
    dim = 64
    out_channels = 8
    num_edges = 1024

    x = jax.random.normal(k_x, (num_nodes, in_channels), jnp.float32)
    edge_index = jax.random.randint(k_e, (2, num_edges), 0, num_nodes, jnp.int32)

    params = init_sage_params(k_p, in_channels, out_channels, dim)

    # row_tile=128 -> grid = (2 phases, 2 row tiles): exercises streaming + scratch reuse.
    out = sagenet_forward(params, x, edge_index, row_tile=128)
    out = jax.block_until_ready(out)

    ref = sagenet_reference(params, x, edge_index)
    assert out.shape == (num_nodes, out_channels)
    err = float(jnp.max(jnp.abs(out - ref)))
    assert jnp.allclose(out, ref, atol=2e-2, rtol=2e-2), err

    print("KERNEL_OK")
</pallas_src>

<mosaic_0001>
module attributes {stable_mosaic.version = 11 : i64} {
  func.func @_fused_sage_kernel(%arg0: i32, %arg1: i32, %arg2: memref<128x256xbf16, #tpu.memory_space<vmem>>, %arg3: memref<256x16xf32, #tpu.memory_space<vmem>>, %arg4: memref<16x64xf32, #tpu.memory_space<vmem>>, %arg5: memref<16x64xf32, #tpu.memory_space<vmem>>, %arg6: memref<1x64xf32, #tpu.memory_space<vmem>>, %arg7: memref<64x128xf32, #tpu.memory_space<vmem>>, %arg8: memref<64x128xf32, #tpu.memory_space<vmem>>, %arg9: memref<1x128xf32, #tpu.memory_space<vmem>>, %arg10: memref<128x128xf32, #tpu.memory_space<vmem>>, %arg11: memref<256x128xf32, #tpu.memory_space<vmem>>, %arg12: memref<256x128xf32, #tpu.memory_space<vmem>>) attributes {dimension_semantics = [#tpu.dimension_semantics<arbitrary>, #tpu.dimension_semantics<arbitrary>], iteration_bounds = array<i64: 2, 2>, scalar_prefetch = 0 : i64, scratch_operands = 2 : i64, tpu.core_type = #tpu.core_type<tc>, window_params = [{transform_indices = @transform_0, window_bounds = array<i64: 128, 256>}, {pipeline_mode = #tpu.pipeline_mode<synchronous>, transform_indices = @transform_1, window_bounds = array<i64: 256, 16>}, {pipeline_mode = #tpu.pipeline_mode<synchronous>, transform_indices = @transform_2, window_bounds = array<i64: 16, 64>}, {pipeline_mode = #tpu.pipeline_mode<synchronous>, transform_indices = @transform_3, window_bounds = array<i64: 16, 64>}, {pipeline_mode = #tpu.pipeline_mode<synchronous>, transform_indices = @transform_4, window_bounds = array<i64: 1, 64>}, {pipeline_mode = #tpu.pipeline_mode<synchronous>, transform_indices = @transform_5, window_bounds = array<i64: 64, 128>}, {pipeline_mode = #tpu.pipeline_mode<synchronous>, transform_indices = @transform_6, window_bounds = array<i64: 64, 128>}, {pipeline_mode = #tpu.pipeline_mode<synchronous>, transform_indices = @transform_7, window_bounds = array<i64: 1, 128>}, {transform_indices = @transform_8, window_bounds = array<i64: 128, 128>}]} {
    %c128_i32 = arith.constant 128 : i32
    %0 = arith.muli %arg1, %c128_i32 : i32
    %1 = tpu.assume_multiple %0, 128 : i32
    %c0_i32 = arith.constant 0 : i32
    %2 = arith.cmpi eq, %arg0, %c0_i32 : i32
    %3 = arith.extui %2 : i1 to i32
    %c0_i32_0 = arith.constant 0 : i32
    %4 = arith.cmpi ne, %3, %c0_i32_0 : i32
    scf.if %4 {
      %c0 = arith.constant 0 : index
      %c0_2 = arith.constant 0 : index
      %8 = vector.load %arg2[%c0, %c0_2] : memref<128x256xbf16, #tpu.memory_space<vmem>>, vector<128x256xbf16>
      %9 = arith.extf %8 : vector<128x256xbf16> to vector<128x256xf32>
      %c0_3 = arith.constant 0 : index
      %c0_4 = arith.constant 0 : index
      %10 = vector.load %arg3[%c0_3, %c0_4] : memref<256x16xf32, #tpu.memory_space<vmem>>, vector<256x16xf32>
      %cst = arith.constant dense<0.000000e+00> : vector<128x16xf32>
      %11 = tpu.matmul %9, %10, %cst {dimension_numbers = #tpu.dot_dimension_numbers<[1], [0], [0], [1], [0, 0, 1, 1], [], []>} : vector<128x256xf32>, vector<256x16xf32>, vector<128x16xf32> -> vector<128x16xf32>
      %c0_5 = arith.constant 0 : index
      %c0_6 = arith.constant 0 : index
      %12 = vector.load %arg4[%c0_5, %c0_6] : memref<16x64xf32, #tpu.memory_space<vmem>>, vector<16x64xf32>
      %cst_7 = arith.constant dense<0.000000e+00> : vector<128x64xf32>
      %13 = tpu.matmul %11, %12, %cst_7 {dimension_numbers = #tpu.dot_dimension_numbers<[1], [0], [0], [1], [0, 0, 1, 1], [], []>} : vector<128x16xf32>, vector<16x64xf32>, vector<128x64xf32> -> vector<128x64xf32>
      %14 = arith.index_cast %1 : i32 to index
      %c0_8 = arith.constant 0 : index
      %15 = vector.load %arg3[%14, %c0_8] : memref<256x16xf32, #tpu.memory_space<vmem>>, vector<128x16xf32>
      %c0_9 = arith.constant 0 : index
      %c0_10 = arith.constant 0 : index
      %16 = vector.load %arg5[%c0_9, %c0_10] : memref<16x64xf32, #tpu.memory_space<vmem>>, vector<16x64xf32>
      %cst_11 = arith.constant dense<0.000000e+00> : vector<128x64xf32>
      %17 = tpu.matmul %15, %16, %cst_11 {dimension_numbers = #tpu.dot_dimension_numbers<[1], [0], [0], [1], [0, 0, 1, 1], [], []>} : vector<128x16xf32>, vector<16x64xf32>, vector<128x64xf32> -> vector<128x64xf32>
      %18 = arith.addf %13, %17 : vector<128x64xf32>
      %c0_12 = arith.constant 0 : index
      %c0_13 = arith.constant 0 : index
      %19 = vector.load %arg6[%c0_12, %c0_13] : memref<1x64xf32, #tpu.memory_space<vmem>>, vector<1x64xf32>
      %20 = vector.broadcast %19 : vector<1x64xf32> to vector<128x64xf32>
      %21 = arith.addf %18, %20 : vector<128x64xf32>
      %cst_14 = arith.constant 0.000000e+00 : f32
      %22 = vector.broadcast %cst_14 : f32 to vector<128x64xf32>
      %23 = arith.maximumf %21, %22 : vector<128x64xf32>
      %c0_15 = arith.constant 0 : index
      %c0_16 = arith.constant 0 : index
      %24 = vector.load %arg7[%c0_15, %c0_16] : memref<64x128xf32, #tpu.memory_space<vmem>>, vector<64x128xf32>
      %cst_17 = arith.constant dense<0.000000e+00> : vector<128x128xf32>
      %25 = tpu.matmul %23, %24, %cst_17 {dimension_numbers = #tpu.dot_dimension_numbers<[1], [0], [0], [1], [0, 0, 1, 1], [], []>} : vector<128x64xf32>, vector<64x128xf32>, vector<128x128xf32> -> vector<128x128xf32>
      %26 = arith.index_cast %1 : i32 to index
      %c0_18 = arith.constant 0 : index
      %27 = vector.load %arg11[%26, %c0_18] : memref<256x128xf32, #tpu.memory_space<vmem>>, vector<128x128xf32>
      tpu.vector_store %arg11[%26, %c0_18], %25 {strides = array<i32>} : memref<256x128xf32, #tpu.memory_space<vmem>>, vector<128x128xf32>,
      %c0_19 = arith.constant 0 : index
      %c0_20 = arith.constant 0 : index
      %28 = vector.load %arg8[%c0_19, %c0_20] : memref<64x128xf32, #tpu.memory_space<vmem>>, vector<64x128xf32>
      %cst_21 = arith.constant dense<0.000000e+00> : vector<128x128xf32>
      %29 = tpu.matmul %23, %28, %cst_21 {dimension_numbers = #tpu.dot_dimension_numbers<[1], [0], [0], [1], [0, 0, 1, 1], [], []>} : vector<128x64xf32>, vector<64x128xf32>, vector<128x128xf32> -> vector<128x128xf32>
      %c0_22 = arith.constant 0 : index
      %c0_23 = arith.constant 0 : index
      %30 = vector.load %arg9[%c0_22, %c0_23] : memref<1x128xf32, #tpu.memory_space<vmem>>, vector<1x128xf32>
      %31 = vector.broadcast %30 : vector<1x128xf32> to vector<128x128xf32>
      %32 = arith.addf %29, %31 : vector<128x128xf32>
      %33 = arith.index_cast %1 : i32 to index
      %c0_24 = arith.constant 0 : index
      %34 = vector.load %arg12[%33, %c0_24] : memref<256x128xf32, #tpu.memory_space<vmem>>, vector<128x128xf32>
      tpu.vector_store %arg12[%33, %c0_24], %32 {strides = array<i32>} : memref<256x128xf32, #tpu.memory_space<vmem>>, vector<128x128xf32>,
    } else {
    }
    %c1_i32 = arith.constant 1 : i32
    %5 = arith.cmpi eq, %arg0, %c1_i32 : i32
    %6 = arith.extui %5 : i1 to i32
    %c0_i32_1 = arith.constant 0 : i32
    %7 = arith.cmpi ne, %6, %c0_i32_1 : i32
    scf.if %7 {
      %c0 = arith.constant 0 : index
      %c0_2 = arith.constant 0 : index
      %8 = vector.load %arg2[%c0, %c0_2] : memref<128x256xbf16, #tpu.memory_space<vmem>>, vector<128x256xbf16>
      %9 = arith.extf %8 : vector<128x256xbf16> to vector<128x256xf32>
      %c0_3 = arith.constant 0 : index
      %c0_4 = arith.constant 0 : index
      %10 = vector.load %arg11[%c0_3, %c0_4] : memref<256x128xf32, #tpu.memory_space<vmem>>, vector<256x128xf32>
      %cst = arith.constant dense<0.000000e+00> : vector<128x128xf32>
      %11 = tpu.matmul %9, %10, %cst {dimension_numbers = #tpu.dot_dimension_numbers<[1], [0], [0], [1], [0, 0, 1, 1], [], []>} : vector<128x256xf32>, vector<256x128xf32>, vector<128x128xf32> -> vector<128x128xf32>
      %12 = arith.index_cast %1 : i32 to index
      %c0_5 = arith.constant 0 : index
      %13 = vector.load %arg12[%12, %c0_5] : memref<256x128xf32, #tpu.memory_space<vmem>>, vector<128x128xf32>
      %14 = arith.addf %11, %13 : vector<128x128xf32>
      %c0_6 = arith.constant 0 : index
      %c0_7 = arith.constant 0 : index
      %15 = vector.load %arg10[%c0_6, %c0_7] : memref<128x128xf32, #tpu.memory_space<vmem>>, vector<128x128xf32>
      tpu.vector_store %arg10[%c0_6, %c0_7], %14 {strides = array<i32>} : memref<128x128xf32, #tpu.memory_space<vmem>>, vector<128x128xf32>,
    } else {
    }
    return
  }
  func.func @transform_0(%arg0: i32, %arg1: i32) -> (i32, i32) {
    %c0_i32 = arith.constant 0 : i32
    %c0_i32_0 = arith.constant 0 : i32
    return %arg1, %c0_i32 : i32, i32
  }
  func.func @transform_1(%arg0: i32, %arg1: i32) -> (i32, i32) {
    %c0_i32 = arith.constant 0 : i32
    %c0_i32_0 = arith.constant 0 : i32
    %c0_i32_1 = arith.constant 0 : i32
    return %c0_i32, %c0_i32_0 : i32, i32
  }
  func.func @transform_2(%arg0: i32, %arg1: i32) -> (i32, i32) {
    %c0_i32 = arith.constant 0 : i32
    %c0_i32_0 = arith.constant 0 : i32
    %c0_i32_1 = arith.constant 0 : i32
    return %c0_i32, %c0_i32_0 : i32, i32
  }
  func.func @transform_3(%arg0: i32, %arg1: i32) -> (i32, i32) {
    %c0_i32 = arith.constant 0 : i32
    %c0_i32_0 = arith.constant 0 : i32
    %c0_i32_1 = arith.constant 0 : i32
    return %c0_i32, %c0_i32_0 : i32, i32
  }
  func.func @transform_4(%arg0: i32, %arg1: i32) -> (i32, i32) {
    %c0_i32 = arith.constant 0 : i32
    %c0_i32_0 = arith.constant 0 : i32
    %c0_i32_1 = arith.constant 0 : i32
    return %c0_i32, %c0_i32_0 : i32, i32
  }
  func.func @transform_5(%arg0: i32, %arg1: i32) -> (i32, i32) {
    %c0_i32 = arith.constant 0 : i32
    %c0_i32_0 = arith.constant 0 : i32
    %c0_i32_1 = arith.constant 0 : i32
    return %c0_i32, %c0_i32_0 : i32, i32
  }
  func.func @transform_6(%arg0: i32, %arg1: i32) -> (i32, i32) {
    %c0_i32 = arith.constant 0 : i32
    %c0_i32_0 = arith.constant 0 : i32
    %c0_i32_1 = arith.constant 0 : i32
    return %c0_i32, %c0_i32_0 : i32, i32
  }
  func.func @transform_7(%arg0: i32, %arg1: i32) -> (i32, i32) {
    %c0_i32 = arith.constant 0 : i32
    %c0_i32_0 = arith.constant 0 : i32
    %c0_i32_1 = arith.constant 0 : i32
    return %c0_i32, %c0_i32_0 : i32, i32
  }
  func.func @transform_8(%arg0: i32, %arg1: i32) -> (i32, i32) {
    %0 = arith.muli %arg0, %arg1 : i32
    %c0_i32 = arith.constant 0 : i32
    %c0_i32_0 = arith.constant 0 : i32
    return %0, %c0_i32 : i32, i32
  }
}

</mosaic_0001>

<llo_original>
// kernel: tpu_custom_call.1
$region0: #{tpu_custom_call.1}
  #allocation0 [shape = 'u32[]', space=smem, size = 0x4, offset = 0x4, fixed_abs, tag = 'smem constant byte address 0x4 - core index']
  #allocation1 [shape = 'u32[144,128]{1,0:T(1,128)}', space=vmem, size = 0x12000, scoped, tag = 'internal scratch']
  #allocation2 [shape = 'f32[256,128]{1,0:T(8,128)}', space=vmem, size = 0x20000, scoped, tag = 'scratch operand']
  #allocation3 [shape = 'f32[256,128]{1,0:T(8,128)}', space=vmem, size = 0x20000, scoped, tag = 'scratch operand']
  %s0 = inlined_call_operand.hbm [shape: bf16[256,256], index: 0, kind: input, shape index: {}]
  %s1 = inlined_call_operand.hbm [shape: f32[256,16], index: 1, kind: input, shape index: {}]
  %s2 = inlined_call_operand.hbm [shape: f32[16,64], index: 2, kind: input, shape index: {}]
  %s3 = inlined_call_operand.hbm [shape: f32[16,64], index: 3, kind: input, shape index: {}]
  %s4 = inlined_call_operand.hbm [shape: f32[1,64], index: 4, kind: input, shape index: {}]
  %s5 = inlined_call_operand.hbm [shape: f32[64,128], index: 5, kind: input, shape index: {}]
  %s6 = inlined_call_operand.hbm [shape: f32[64,128], index: 6, kind: input, shape index: {}]
  %s7 = inlined_call_operand.hbm [shape: f32[1,128], index: 7, kind: input, shape index: {}]
  %s8 = inlined_call_operand.hbm [shape: f32[256,128], index: 8, kind: output, shape index: {}]
  %s9 = sld [smem:[#allocation0]]
  $region105: #{tpu_custom_call.1} parent=0
    _
  %s11 = ssub.s32 1, %s9
  %s12 = scalar_select 0, %s11, %s9
  $region1: #{tpu_custom_call.1} parent=0
    #allocation4 [shape = 'u8[131072]{0}', space=vmem, size = 0x20000, scoped, tag = 'input window, operand 0']
    #allocation5 [shape = 's32[2]{0}', space=sflag, size = 0x8, scoped, tag = 'scoped memory for tpu_custom_call.1']
    #allocation6 [shape = 's32[2]{0}', space=sflag, size = 0x8, scoped, tag = 'scoped memory for tpu_custom_call.1']
    #allocation7 [shape = 'u8[131072]{0}', space=vmem, size = 0x20000, scoped, tag = 'input window, operand 1, single buffered']
    #allocation8 [shape = 's32[1]{0}', space=sflag, size = 0x4, scoped, tag = 'scoped memory for tpu_custom_call.1']
    #allocation9 [shape = 'u8[8192]{0}', space=vmem, size = 0x2000, scoped, tag = 'input window, operand 2, single buffered']
    #allocation10 [shape = 'u8[8192]{0}', space=vmem, size = 0x2000, scoped, tag = 'input window, operand 3, single buffered']
    #allocation11 [shape = 's32[1]{0}', space=sflag, size = 0x4, scoped, tag = 'scoped memory for tpu_custom_call.1']
    #allocation12 [shape = 'u8[512]{0}', space=vmem, size = 0x400, scoped, tag = 'input window, operand 4, single buffered']
    #allocation13 [shape = 'u8[32768]{0}', space=vmem, size = 0x8000, scoped, tag = 'input window, operand 5, single buffered']
    #allocation14 [shape = 's32[1]{0}', space=sflag, size = 0x4, scoped, tag = 'scoped memory for tpu_custom_call.1']
    #allocation15 [shape = 'u8[32768]{0}', space=vmem, size = 0x8000, scoped, tag = 'input window, operand 6, single buffered']
    #allocation16 [shape = 'u8[512]{0}', space=vmem, size = 0x400, scoped, tag = 'input window, operand 7, single buffered']
    #allocation17 [shape = 's32[1]{0}', space=sflag, size = 0x4, scoped, tag = 'scoped memory for tpu_custom_call.1']
    #allocation18 [shape = 'u8[131072]{0}', space=vmem, size = 0x20000, scoped, tag = 'output window, operand 0']
    %13 = vsyncpa [#allocation5], 0
    %s14 = scalar_lea.sflag [#allocation5], 1
    %15 = vsyncpa %s14, 0
    %16 = vsyncpa [#allocation8], 0
    %17 = vsyncpa [#allocation11], 0
    %18 = vsyncpa [#allocation14], 0
    %19 = vsyncpa [#allocation17], 0
    %20 = vsyncpa [#allocation6], 0
    %s21 = scalar_lea.sflag [#allocation6], 1
    %22 = vsyncpa %s21, 0
    loop: start=0, step=1, limit=6
    $region2: #{tpu_custom_call.1} parent=1 // loop_pre_header
      _
    $region3: #{tpu_custom_call.1} parent=1 // loop_header
      %s24 = sphi 0, %s28
      %p25 = scmp.ge.s32.totalorder %s24, 6
      %s31 = sphi 0, %s43
      %s32 = sphi 0, %s39
      %s33 = sphi 0, %s31
      %s34 = sphi 0, %s32
      %s35 = sphi 0, %s33
      %s36 = sphi 0, %s34
      %s46 = sphi 0, %s48
      %s49 = sphi 0, %s46
      %s50 = sphi 0, %s49
      %s66 = sphi 0, %s50
      %s70 = sphi 0, %s70
      %s72 = sphi 0, %s70
      %s73 = sphi 0, %s72
      %s87 = sphi 0, %s73
      %s91 = sphi 0, %s91
      %s93 = sphi 0, %s91
      %s94 = sphi 0, %s93
      %s108 = sphi 0, %s94
      %s112 = sphi 0, %s112
      %s114 = sphi 0, %s112
      %s115 = sphi 0, %s114
      %s129 = sphi 0, %s115
      %s133 = sphi 0, %s133
      %s135 = sphi 0, %s133
      %s136 = sphi 0, %s135
      %s150 = sphi 0, %s136
      %s154 = sphi 0, %s154
      %s156 = sphi 0, %s154
      %s157 = sphi 0, %s156
      %s171 = sphi 0, %s157
      %s175 = sphi 0, %s175
      %s177 = sphi 0, %s175
      %s178 = sphi 0, %s177
      %s192 = sphi 0, %s178
      %s196 = sphi 0, %s196
      %s198 = sphi 0, %s196
      %s199 = sphi 0, %s198
      %s213 = sphi 0, %s199
      %s221 = sphi 0, %s223
      %s224 = sphi 0, %s221
      %s225 = sphi 0, %s224
      %s241 = sphi 0, %s225
    $region4: #{tpu_custom_call.1} parent=1 // loop_header_branch
      %27 = sbr.rel (%p25) target = $region8
    $region5: #{tpu_custom_call.1} parent=1 // loop_body
      %s29 = ssub.s32 %s24, 1
      %s30 = ssub.s32 %s24, 2
      %s37 = sadd.s32 1, %s32
      %p38 = scmp.ge.s32.totalorder %s37, 2
      %s39 = scalar_select %p38, 0, %s37
      %s40 = sadd.s32 1, %s31
      %s41 = scalar_select %p38, %s40, %s31
      %p42 = scmp.ge.s32.totalorder %s41, 2
      %s43 = scalar_select %p42, 0, %s41
      %s44 = ssub.s32 %s32, %s39
      %p45 = scmp.eq.s32.totalorder %s44, 0
      %s47 = sadd.s32 %s46, 1
      %s48 = scalar_select %p45, %s46, %s47
      %p51 = pneg %p45
      %p52 = scmp.eq.s32.totalorder %s24, 3
      %p53 = por %p51, %p52
      %p54 = scmp.ne.s32.totalorder %s46, %s49
      %p55 = scmp.eq.s32.totalorder %s24, 0
      %p56 = por %p54, %p55
      %p57 = scmp.ne.s32.totalorder %s46, %s49
      %p58 = scmp.eq.s32.totalorder %s29, 3
      %p59 = por %p57, %p58
      %p60 = scmp.ne.s32.totalorder %s49, %s50
      %p61 = scmp.eq.s32.totalorder %s29, 0
      %p62 = por %p60, %p61
      %p63 = scmp.ne.s32.totalorder %s49, %s50
      %p64 = scmp.eq.s32.totalorder %s30, 3
      %p65 = por %p63, %p64
      %p67 = scmp.ne.s32.totalorder %s50, %s66
      %p68 = scmp.eq.s32.totalorder %s30, 0
      %p69 = por %p67, %p68
      %s71 = sadd.s32 %s70, 1
      %p74 = scmp.eq.s32.totalorder %s24, 3
      %p75 = scmp.ne.s32.totalorder %s70, %s72
      %p76 = scmp.eq.s32.totalorder %s24, 0
      %p77 = por %p75, %p76
      %p78 = scmp.ne.s32.totalorder %s70, %s72
      %p79 = scmp.eq.s32.totalorder %s29, 3
      %p80 = por %p78, %p79
      %p81 = scmp.ne.s32.totalorder %s72, %s73
      %p82 = scmp.eq.s32.totalorder %s29, 0
      %p83 = por %p81, %p82
      %p84 = scmp.ne.s32.totalorder %s72, %s73
      %p85 = scmp.eq.s32.totalorder %s30, 3
      %p86 = por %p84, %p85
      %p88 = scmp.ne.s32.totalorder %s73, %s87
      %p89 = scmp.eq.s32.totalorder %s30, 0
      %p90 = por %p88, %p89
      %s92 = sadd.s32 %s91, 1
      %p95 = scmp.eq.s32.totalorder %s24, 3
      %p96 = scmp.ne.s32.totalorder %s91, %s93
      %p97 = scmp.eq.s32.totalorder %s24, 0
      %p98 = por %p96, %p97
      %p99 = scmp.ne.s32.totalorder %s91, %s93
      %p100 = scmp.eq.s32.totalorder %s29, 3
      %p101 = por %p99, %p100
      %p102 = scmp.ne.s32.totalorder %s93, %s94
      %p103 = scmp.eq.s32.totalorder %s29, 0
      %p104 = por %p102, %p103
      %p105 = scmp.ne.s32.totalorder %s93, %s94
      %p106 = scmp.eq.s32.totalorder %s30, 3
      %p107 = por %p105, %p106
      %p109 = scmp.ne.s32.totalorder %s94, %s108
      %p110 = scmp.eq.s32.totalorder %s30, 0
      %p111 = por %p109, %p110
      %s113 = sadd.s32 %s112, 1
      %p116 = scmp.eq.s32.totalorder %s24, 3
      %p117 = scmp.ne.s32.totalorder %s112, %s114
      %p118 = scmp.eq.s32.totalorder %s24, 0
      %p119 = por %p117, %p118
      %p120 = scmp.ne.s32.totalorder %s112, %s114
      %p121 = scmp.eq.s32.totalorder %s29, 3
      %p122 = por %p120, %p121
      %p123 = scmp.ne.s32.totalorder %s114, %s115
      %p124 = scmp.eq.s32.totalorder %s29, 0
      %p125 = por %p123, %p124
      %p126 = scmp.ne.s32.totalorder %s114, %s115
      %p127 = scmp.eq.s32.totalorder %s30, 3
      %p128 = por %p126, %p127
      %p130 = scmp.ne.s32.totalorder %s115, %s129
      %p131 = scmp.eq.s32.totalorder %s30, 0
      %p132 = por %p130, %p131
      %s134 = sadd.s32 %s133, 1
      %p137 = scmp.eq.s32.totalorder %s24, 3
      %p138 = scmp.ne.s32.totalorder %s133, %s135
      %p139 = scmp.eq.s32.totalorder %s24, 0
      %p140 = por %p138, %p139
      %p141 = scmp.ne.s32.totalorder %s133, %s135
      %p142 = scmp.eq.s32.totalorder %s29, 3
      %p143 = por %p141, %p142
      %p144 = scmp.ne.s32.totalorder %s135, %s136
      %p145 = scmp.eq.s32.totalorder %s29, 0
      %p146 = por %p144, %p145
      %p147 = scmp.ne.s32.totalorder %s135, %s136
      %p148 = scmp.eq.s32.totalorder %s30, 3
      %p149 = por %p147, %p148
      %p151 = scmp.ne.s32.totalorder %s136, %s150
      %p152 = scmp.eq.s32.totalorder %s30, 0
      %p153 = por %p151, %p152
      %s155 = sadd.s32 %s154, 1
      %p158 = scmp.eq.s32.totalorder %s24, 3
      %p159 = scmp.ne.s32.totalorder %s154, %s156
      %p160 = scmp.eq.s32.totalorder %s24, 0
      %p161 = por %p159, %p160
      %p162 = scmp.ne.s32.totalorder %s154, %s156
      %p163 = scmp.eq.s32.totalorder %s29, 3
      %p164 = por %p162, %p163
      %p165 = scmp.ne.s32.totalorder %s156, %s157
      %p166 = scmp.eq.s32.totalorder %s29, 0
      %p167 = por %p165, %p166
      %p168 = scmp.ne.s32.totalorder %s156, %s157
      %p169 = scmp.eq.s32.totalorder %s30, 3
      %p170 = por %p168, %p169
      %p172 = scmp.ne.s32.totalorder %s157, %s171
      %p173 = scmp.eq.s32.totalorder %s30, 0
      %p174 = por %p172, %p173
      %s176 = sadd.s32 %s175, 1
      %p179 = scmp.eq.s32.totalorder %s24, 3
      %p180 = scmp.ne.s32.totalorder %s175, %s177
      %p181 = scmp.eq.s32.totalorder %s24, 0
      %p182 = por %p180, %p181
      %p183 = scmp.ne.s32.totalorder %s175, %s177
      %p184 = scmp.eq.s32.totalorder %s29, 3
      %p185 = por %p183, %p184
      %p186 = scmp.ne.s32.totalorder %s177, %s178
      %p187 = scmp.eq.s32.totalorder %s29, 0
      %p188 = por %p186, %p187
      %p189 = scmp.ne.s32.totalorder %s177, %s178
      %p190 = scmp.eq.s32.totalorder %s30, 3
      %p191 = por %p189, %p190
      %p193 = scmp.ne.s32.totalorder %s178, %s192
      %p194 = scmp.eq.s32.totalorder %s30, 0
      %p195 = por %p193, %p194
      %s197 = sadd.s32 %s196, 1
      %p200 = scmp.eq.s32.totalorder %s24, 3
      %p201 = scmp.ne.s32.totalorder %s196, %s198
      %p202 = scmp.eq.s32.totalorder %s24, 0
      %p203 = por %p201, %p202
      %p204 = scmp.ne.s32.totalorder %s196, %s198
      %p205 = scmp.eq.s32.totalorder %s29, 3
      %p206 = por %p204, %p205
      %p207 = scmp.ne.s32.totalorder %s198, %s199
      %p208 = scmp.eq.s32.totalorder %s29, 0
      %p209 = por %p207, %p208
      %p210 = scmp.ne.s32.totalorder %s198, %s199
      %p211 = scmp.eq.s32.totalorder %s30, 3
      %p212 = por %p210, %p211
      %p214 = scmp.ne.s32.totalorder %s199, %s213
      %p215 = scmp.eq.s32.totalorder %s30, 0
      %p216 = por %p214, %p215
      %s217 = smul.u32 %s31, %s32
      %s218 = smul.u32 %s43, %s39
      %s219 = ssub.s32 %s217, %s218
      %p220 = scmp.eq.s32.totalorder %s219, 0
      %s222 = sadd.s32 %s221, 1
      %s223 = scalar_select %p220, %s221, %s222
      %p226 = pneg %p220
      %p227 = scmp.eq.s32.totalorder %s24, 3
      %p228 = por %p226, %p227
      %p229 = scmp.ne.s32.totalorder %s221, %s224
      %p230 = scmp.eq.s32.totalorder %s24, 0
      %p231 = por %p229, %p230
      %p232 = scmp.ne.s32.totalorder %s221, %s224
      %p233 = scmp.eq.s32.totalorder %s29, 3
      %p234 = por %p232, %p233
      %p235 = scmp.ne.s32.totalorder %s224, %s225
      %p236 = scmp.eq.s32.totalorder %s29, 0
      %p237 = por %p235, %p236
      %p238 = scmp.ne.s32.totalorder %s224, %s225
      %p239 = scmp.eq.s32.totalorder %s30, 3
      %p240 = por %p238, %p239
      %p242 = scmp.ne.s32.totalorder %s225, %s241
      %p243 = scmp.eq.s32.totalorder %s30, 0
      %p244 = por %p242, %p243
      %p245 = scmp.le.s32.totalorder 1, %s24
      %p246 = scmp.lt.s32.totalorder %s24, 5
      %p247 = pnand %p245, %p246
      %p248 = pneg %p247
      // Predicated region
      $region9: #{tpu_custom_call.1} parent=5 // pred_check
        _
      $region10: #{tpu_custom_call.1} parent=5 // pred_check_branch
        %250 = sbr.rel (%p247) target = $region12
      $region11: #{tpu_custom_call.1} parent=5 // pred_region
        %s251 = ssub.s32 %s24, 1
        // Predicated region
        $region13: #{tpu_custom_call.1} parent=11 // pred_check
          %p252 = pneg %p83
        $region14: #{tpu_custom_call.1} parent=11 // pred_check_branch
          %254 = sbr.rel (%p252) target = $region16
        $region15: #{tpu_custom_call.1} parent=11 // pred_region
          %s256 = ssub.s32 4096, 4096
          %257 = vsyncadd [#allocation8], %s256
          %s258 = sshll.u32 [#allocation7], 4
          %s259 = int_to_ptr.vmem [resolvable:$true] %s258
          %264 = dma.hbm_to_vmem [thread:$0]  %s1, 4096, %s259, [#allocation8], 128, 128, 8
        $region16: #{tpu_custom_call.1} parent=11 // pred_fallthru
          _
        // Predicated region
        $region17: #{tpu_custom_call.1} parent=11 // pred_check
          %p265 = pneg %p104
        $region18: #{tpu_custom_call.1} parent=11 // pred_check_branch
          %267 = sbr.rel (%p265) target = $region20
        $region19: #{tpu_custom_call.1} parent=11 // pred_region
          %s269 = ssub.s32 256, 256
          %270 = vsyncadd [#allocation8], %s269
          %s271 = sshll.u32 [#allocation9], 4
          %s272 = int_to_ptr.vmem [resolvable:$true] %s271
          %277 = dma.hbm_to_vmem [thread:$0]  %s2, 256, %s272, [#allocation8], 128, 128, 8
        $region20: #{tpu_custom_call.1} parent=11 // pred_fallthru
          _
        // Predicated region
        $region21: #{tpu_custom_call.1} parent=11 // pred_check
          %p278 = pneg %p125
        $region22: #{tpu_custom_call.1} parent=11 // pred_check_branch
          %280 = sbr.rel (%p278) target = $region24
        $region23: #{tpu_custom_call.1} parent=11 // pred_region
          %s282 = ssub.s32 256, 256
          %283 = vsyncadd [#allocation11], %s282
          %s284 = sshll.u32 [#allocation10], 4
          %s285 = int_to_ptr.vmem [resolvable:$true] %s284
          %290 = dma.hbm_to_vmem [thread:$0]  %s3, 256, %s285, [#allocation11], 128, 128, 8
        $region24: #{tpu_custom_call.1} parent=11 // pred_fallthru
          _
        // Predicated region
        $region25: #{tpu_custom_call.1} parent=11 // pred_check
          %p291 = pneg %p146
        $region26: #{tpu_custom_call.1} parent=11 // pred_check_branch
          %293 = sbr.rel (%p291) target = $region28
        $region27: #{tpu_custom_call.1} parent=11 // pred_region
          %s295 = ssub.s32 16, 16
          %296 = vsyncadd [#allocation11], %s295
          %s298 = sshll.u32 [#allocation12], 4
          %s299 = int_to_ptr.vmem [resolvable:$true] %s298
          %301 = dma.hbm_to_vmem [thread:$0]  %s4, 16, %s299, [#allocation11]
        $region28: #{tpu_custom_call.1} parent=11 // pred_fallthru
          _
        // Predicated region
        $region29: #{tpu_custom_call.1} parent=11 // pred_check
          %p302 = pneg %p167
        $region30: #{tpu_custom_call.1} parent=11 // pred_check_branch
          %304 = sbr.rel (%p302) target = $region32
        $region31: #{tpu_custom_call.1} parent=11 // pred_region
          %s306 = ssub.s32 1024, 1024
          %307 = vsyncadd [#allocation14], %s306
          %s308 = sshll.u32 [#allocation13], 4
          %s309 = int_to_ptr.vmem [resolvable:$true] %s308
          %314 = dma.hbm_to_vmem [thread:$0]  %s5, 1024, %s309, [#allocation14], 128, 128, 8
        $region32: #{tpu_custom_call.1} parent=11 // pred_fallthru
          _
        // Predicated region
        $region33: #{tpu_custom_call.1} parent=11 // pred_check
          %p315 = pneg %p188
        $region34: #{tpu_custom_call.1} parent=11 // pred_check_branch
          %317 = sbr.rel (%p315) target = $region36
        $region35: #{tpu_custom_call.1} parent=11 // pred_region
          %s319 = ssub.s32 1024, 1024
          %320 = vsyncadd [#allocation14], %s319
          %s321 = sshll.u32 [#allocation15], 4
          %s322 = int_to_ptr.vmem [resolvable:$true] %s321
          %327 = dma.hbm_to_vmem [thread:$0]  %s6, 1024, %s322, [#allocation14], 128, 128, 8
        $region36: #{tpu_custom_call.1} parent=11 // pred_fallthru
          _
        // Predicated region
        $region37: #{tpu_custom_call.1} parent=11 // pred_check
          %p328 = pneg %p209
        $region38: #{tpu_custom_call.1} parent=11 // pred_check_branch
          %330 = sbr.rel (%p328) target = $region40
        $region39: #{tpu_custom_call.1} parent=11 // pred_region
          %s332 = ssub.s32 16, 16
          %333 = vsyncadd [#allocation17], %s332
          %s335 = sshll.u32 [#allocation16], 4
          %s336 = int_to_ptr.vmem [resolvable:$true] %s335
          %338 = dma.hbm_to_vmem [thread:$0]  %s7, 16, %s336, [#allocation17]
        $region40: #{tpu_custom_call.1} parent=11 // pred_fallthru
          _
      $region12: #{tpu_custom_call.1} parent=5 // pred_fallthru
        _
      %p339 = scmp.lt.s32.totalorder %s24, 4
      // Predicated region
      $region41: #{tpu_custom_call.1} parent=5 // pred_check
        %p340 = pneg %p339
      $region42: #{tpu_custom_call.1} parent=5 // pred_check_branch
        %342 = sbr.rel (%p340) target = $region44
      $region43: #{tpu_custom_call.1} parent=5 // pred_region
        // Predicated region
        $region45: #{tpu_custom_call.1} parent=43 // pred_check
          %p343 = pneg %p56
        $region46: #{tpu_custom_call.1} parent=43 // pred_check_branch
          %345 = sbr.rel (%p343) target = $region48
        $region47: #{tpu_custom_call.1} parent=43 // pred_region
          %s346 = sand.u32 %s46, 1
          %s347 = scalar_lea.sflag [#allocation5], %s346
          %s348 = sand.u32 %s46, 1
          %s349 = smul.addr %s348, 128
          %s350 = scalar_lea.vmem [#allocation4], %s349
          %s351 = smul.u32 16, %s32
          %s353 = ssub.s32 2048, 2048
          %354 = vsyncadd %s347, %s353
          %s355 = smul.addr %s351, 2
          %s356 = smul.addr %s355, 64
          %s357 = scalar_lea.hbm %s0, %s356
          %s358 = sshll.u32 %s350, 4
          %s359 = int_to_ptr.vmem [resolvable:$true] %s358
          %364 = dma.hbm_to_vmem [thread:$0]  %s357, 2048, %s359, %s347, 128, 128, 8
        $region48: #{tpu_custom_call.1} parent=43 // pred_fallthru
          _
      $region44: #{tpu_custom_call.1} parent=5 // pred_fallthru
        _
      %p365 = scmp.le.s32.totalorder 1, %s24
      %p366 = scmp.lt.s32.totalorder %s24, 5
      %p367 = pnand %p365, %p366
      %p368 = pneg %p367
      // Predicated region
      $region49: #{tpu_custom_call.1} parent=5 // pred_check
        _
      $region50: #{tpu_custom_call.1} parent=5 // pred_check_branch
        %370 = sbr.rel (%p367) target = $region52
      $region51: #{tpu_custom_call.1} parent=5 // pred_region
        %s371 = ssub.s32 %s24, 1
        %s372 = sand.u32 %s49, 1
        %s373 = scalar_lea.sflag [#allocation5], %s372
        %s374 = sand.u32 %s49, 1
        %s375 = smul.addr %s374, 128
        %s376 = scalar_lea.vmem [#allocation4], %s375
        // Predicated region
        $region53: #{tpu_custom_call.1} parent=51 // pred_check
          %p377 = pneg %p62
        $region54: #{tpu_custom_call.1} parent=51 // pred_check_branch
          %379 = sbr.rel (%p377) target = $region56
        $region55: #{tpu_custom_call.1} parent=51 // pred_region
          %380 = dma.done %s373, 2048
        $region56: #{tpu_custom_call.1} parent=51 // pred_fallthru
          _
        // Predicated region
        $region57: #{tpu_custom_call.1} parent=51 // pred_check
          %p381 = pneg %p83
        $region58: #{tpu_custom_call.1} parent=51 // pred_check_branch
          %383 = sbr.rel (%p381) target = $region60
        $region59: #{tpu_custom_call.1} parent=51 // pred_region
          %384 = dma.done [#allocation8], 4096
        $region60: #{tpu_custom_call.1} parent=51 // pred_fallthru
          _
        // Predicated region
        $region61: #{tpu_custom_call.1} parent=51 // pred_check
          %p385 = pneg %p104
        $region62: #{tpu_custom_call.1} parent=51 // pred_check_branch
          %387 = sbr.rel (%p385) target = $region64
        $region63: #{tpu_custom_call.1} parent=51 // pred_region
          %388 = dma.done [#allocation8], 256
        $region64: #{tpu_custom_call.1} parent=51 // pred_fallthru
          _
        // Predicated region
        $region65: #{tpu_custom_call.1} parent=51 // pred_check
          %p389 = pneg %p125
        $region66: #{tpu_custom_call.1} parent=51 // pred_check_branch
          %391 = sbr.rel (%p389) target = $region68
        $region67: #{tpu_custom_call.1} parent=51 // pred_region
          %392 = dma.done [#allocation11], 256
        $region68: #{tpu_custom_call.1} parent=51 // pred_fallthru
          _
        // Predicated region
        $region69: #{tpu_custom_call.1} parent=51 // pred_check
          %p393 = pneg %p146
        $region70: #{tpu_custom_call.1} parent=51 // pred_check_branch
          %395 = sbr.rel (%p393) target = $region72
        $region71: #{tpu_custom_call.1} parent=51 // pred_region
          %396 = dma.done [#allocation11], 16
        $region72: #{tpu_custom_call.1} parent=51 // pred_fallthru
          _
        // Predicated region
        $region73: #{tpu_custom_call.1} parent=51 // pred_check
          %p397 = pneg %p167
        $region74: #{tpu_custom_call.1} parent=51 // pred_check_branch
          %399 = sbr.rel (%p397) target = $region76
        $region75: #{tpu_custom_call.1} parent=51 // pred_region
          %400 = dma.done [#allocation14], 1024
        $region76: #{tpu_custom_call.1} parent=51 // pred_fallthru
          _
        // Predicated region
        $region77: #{tpu_custom_call.1} parent=51 // pred_check
          %p401 = pneg %p188
        $region78: #{tpu_custom_call.1} parent=51 // pred_check_branch
          %403 = sbr.rel (%p401) target = $region80
        $region79: #{tpu_custom_call.1} parent=51 // pred_region
          %404 = dma.done [#allocation14], 1024
        $region80: #{tpu_custom_call.1} parent=51 // pred_fallthru
          _
        // Predicated region
        $region81: #{tpu_custom_call.1} parent=51 // pred_check
          %p405 = pneg %p209
        $region82: #{tpu_custom_call.1} parent=51 // pred_check_branch
          %407 = sbr.rel (%p405) target = $region84
        $region83: #{tpu_custom_call.1} parent=51 // pred_region
          %408 = dma.done [#allocation17], 16
        $region84: #{tpu_custom_call.1} parent=51 // pred_fallthru
          _
        %s409 = sand.u32 %s49, 1
        %s410 = scalar_lea.sflag [#allocation5], %s409
        %s411 = sand.u32 %s49, 1
        %s412 = smul.addr %s411, 128
        %s413 = scalar_lea.vmem [#allocation4], %s412
        %p414 = pneg %p62
        %p415 = pneg %p59
        %p416 = pneg %p83
        %p417 = pneg %p80
        %p418 = pneg %p104
        %p419 = pneg %p101
        %p420 = pneg %p125
        %p421 = pneg %p122
        %p422 = pneg %p146
        %p423 = pneg %p143
        %p424 = pneg %p167
        %p425 = pneg %p164
        %p426 = pneg %p188
        %p427 = pneg %p185
        %p428 = pneg %p209
        %p429 = pneg %p206
        %p430 = pneg %p237
        %p431 = pneg %p234
        %s432 = sand.u32 %s224, 1
        %s433 = scalar_lea.sflag [#allocation6], %s432
        %s434 = sand.u32 %s224, 1
        %s435 = smul.addr %s434, 128
        %s436 = scalar_lea.vmem [#allocation18], %s435
        %s437 = smul.u32 16, %s34
        %s438 = smul.u32 %s33, %s34
        %s439 = smul.u32 16, %s438
        %s440 = smul.u32 %s34, 128
        %p441 = scmp.eq.s32.totalorder %s33, 0
        // Predicated region
        $region85: #{tpu_custom_call.1} parent=51 // pred_check
          %p442 = pneg %p441
        $region86: #{tpu_custom_call.1} parent=51 // pred_check_branch
          %444 = sbr.rel (%p442) target = $region88
        $region87: #{tpu_custom_call.1} parent=51 // pred_region
          %v445 = vld [vmem:[%s376] sm:$0xff]
          %v446 = vld [vmem:[%s376 + $0x8] sm:$0xff]
          %v447 = vld [vmem:[%s376 + $0x10] sm:$0xff]
          %v448 = vld [vmem:[%s376 + $0x18] sm:$0xff]
          %v449 = vld [vmem:[%s376 + $0x20] sm:$0xff]
          %v450 = vld [vmem:[%s376 + $0x28] sm:$0xff]
          %v451 = vld [vmem:[%s376 + $0x30] sm:$0xff]
          %v452 = vld [vmem:[%s376 + $0x38] sm:$0xff]
          %v453 = vld [vmem:[%s376 + $0x40] sm:$0xff]
          %v454 = vld [vmem:[%s376 + $0x48] sm:$0xff]
          %v455 = vld [vmem:[%s376 + $0x50] sm:$0xff]
          %v456 = vld [vmem:[%s376 + $0x58] sm:$0xff]
          %v457 = vld [vmem:[%s376 + $0x60] sm:$0xff]
          %v458 = vld [vmem:[%s376 + $0x68] sm:$0xff]
          %v459 = vld [vmem:[%s376 + $0x70] sm:$0xff]
          %v460 = vld [vmem:[%s376 + $0x78] sm:$0xff]
          %v461 = vunpack.c.l.bf16 %v445
          %v462 = vunpack.c.h.bf16 %v445
          %v463 = vunpack.c.l.bf16 %v446
          %v464 = vunpack.c.h.bf16 %v446
          %v465 = vunpack.c.l.bf16 %v447
          %v466 = vunpack.c.h.bf16 %v447
          %v467 = vunpack.c.l.bf16 %v448
          %v468 = vunpack.c.h.bf16 %v448
          %v469 = vunpack.c.l.bf16 %v449
          %v470 = vunpack.c.h.bf16 %v449
          %v471 = vunpack.c.l.bf16 %v450
          %v472 = vunpack.c.h.bf16 %v450
          %v473 = vunpack.c.l.bf16 %v451
          %v474 = vunpack.c.h.bf16 %v451
          %v475 = vunpack.c.l.bf16 %v452
          %v476 = vunpack.c.h.bf16 %v452
          %v477 = vunpack.c.l.bf16 %v453
          %v478 = vunpack.c.h.bf16 %v453
          %v479 = vunpack.c.l.bf16 %v454
          %v480 = vunpack.c.h.bf16 %v454
          %v481 = vunpack.c.l.bf16 %v455
          %v482 = vunpack.c.h.bf16 %v455
          %v483 = vunpack.c.l.bf16 %v456
          %v484 = vunpack.c.h.bf16 %v456
          %v485 = vunpack.c.l.bf16 %v457
          %v486 = vunpack.c.h.bf16 %v457
          %v487 = vunpack.c.l.bf16 %v458
          %v488 = vunpack.c.h.bf16 %v458
          %v489 = vunpack.c.l.bf16 %v459
          %v490 = vunpack.c.h.bf16 %v459
          %v491 = vunpack.c.l.bf16 %v460
          %v492 = vunpack.c.h.bf16 %v460
          %v493 = vld [vmem:[#allocation7] sm:$0xff]
          %v494 = vld [vmem:[#allocation7 + $0x8] sm:$0xff]
          %v495 = vld [vmem:[#allocation7 + $0x10] sm:$0xff]
          %v496 = vld [vmem:[#allocation7 + $0x18] sm:$0xff]
          %v497 = vld [vmem:[#allocation7 + $0x20] sm:$0xff]
          %v498 = vld [vmem:[#allocation7 + $0x28] sm:$0xff]
          %v499 = vld [vmem:[#allocation7 + $0x30] sm:$0xff]
          %v500 = vld [vmem:[#allocation7 + $0x38] sm:$0xff]
          %v501 = vld [vmem:[#allocation7 + $0x40] sm:$0xff]
          %v502 = vld [vmem:[#allocation7 + $0x48] sm:$0xff]
          %v503 = vld [vmem:[#allocation7 + $0x50] sm:$0xff]
          %v504 = vld [vmem:[#allocation7 + $0x58] sm:$0xff]
          %v505 = vld [vmem:[#allocation7 + $0x60] sm:$0xff]
          %v506 = vld [vmem:[#allocation7 + $0x68] sm:$0xff]
          %v507 = vld [vmem:[#allocation7 + $0x70] sm:$0xff]
          %v508 = vld [vmem:[#allocation7 + $0x78] sm:$0xff]
          %v509 = vld [vmem:[#allocation7 + $0x80] sm:$0xff]
          %v510 = vld [vmem:[#allocation7 + $0x88] sm:$0xff]
          %v511 = vld [vmem:[#allocation7 + $0x90] sm:$0xff]
          %v512 = vld [vmem:[#allocation7 + $0x98] sm:$0xff]
          %v513 = vld [vmem:[#allocation7 + $0xa0] sm:$0xff]
          %v514 = vld [vmem:[#allocation7 + $0xa8] sm:$0xff]
          %v515 = vld [vmem:[#allocation7 + $0xb0] sm:$0xff]
          %v516 = vld [vmem:[#allocation7 + $0xb8] sm:$0xff]
          %v517 = vld [vmem:[#allocation7 + $0xc0] sm:$0xff]
          %v518 = vld [vmem:[#allocation7 + $0xc8] sm:$0xff]
          %v519 = vld [vmem:[#allocation7 + $0xd0] sm:$0xff]
          %v520 = vld [vmem:[#allocation7 + $0xd8] sm:$0xff]
          %v521 = vld [vmem:[#allocation7 + $0xe0] sm:$0xff]
          %v522 = vld [vmem:[#allocation7 + $0xe8] sm:$0xff]
          %v523 = vld [vmem:[#allocation7 + $0xf0] sm:$0xff]
          %v524 = vld [vmem:[#allocation7 + $0xf8] sm:$0xff]
          %525 = vmatprep.subr.mxu0 0.0
          %526 = vmatpush1.msra.mxu0 %v493
          %527 = vmatprep.subr.mxu0 0.0
          %528 = vmatpush1.msra.mxu0 %v494
          %529 = vmatprep.subr.mxu0 0.0
          %530 = vmatpush1.msra.mxu0 %v495
          %531 = vmatprep.subr.mxu0 0.0
          %532 = vmatpush1.msra.mxu0 %v496
          %533 = vmatprep.subr.mxu0 0.0
          %534 = vmatpush1.msra.mxu0 %v497
          %535 = vmatprep.subr.mxu0 0.0
          %536 = vmatpush1.msra.mxu0 %v498
          %537 = vmatprep.subr.mxu0 0.0
          %538 = vmatpush1.msra.mxu0 %v499
          %539 = vmatprep.subr.mxu0 0.0
          %540 = vmatpush1.msra.mxu0 %v500
          %541 = vmatprep.subr.mxu0 0.0
          %542 = vmatpush1.msra.mxu0 %v501
          %543 = vmatprep.subr.mxu0 0.0
          %544 = vmatpush1.msra.mxu0 %v502
          %545 = vmatprep.subr.mxu0 0.0
          %546 = vmatpush1.msra.mxu0 %v503
          %547 = vmatprep.subr.mxu0 0.0
          %548 = vmatpush1.msra.mxu0 %v504
          %549 = vmatprep.subr.mxu0 0.0
          %550 = vmatpush1.msra.mxu0 %v505
          %551 = vmatprep.subr.mxu0 0.0
          %552 = vmatpush1.msra.mxu0 %v506
          %553 = vmatprep.subr.mxu0 0.0
          %554 = vmatpush1.msra.mxu0 %v507
          %555 = vmatprep.subr.mxu0 0.0
          %556 = vmatpush1.msra.mxu0 %v508
          %557 = vmatprep.subr.mxu0 0.0
          %558 = vmatpush1.msra.mxu0 %v509
          %559 = vmatprep.subr.mxu0 0.0
          %560 = vmatpush1.msra.mxu0 %v510
          %561 = vmatprep.subr.mxu0 0.0
          %562 = vmatpush1.msra.mxu0 %v511
          %563 = vmatprep.subr.mxu0 0.0
          %564 = vmatpush1.msra.mxu0 %v512
          %565 = vmatprep.subr.mxu0 0.0
          %566 = vmatpush1.msra.mxu0 %v513
          %567 = vmatprep.subr.mxu0 0.0
          %568 = vmatpush1.msra.mxu0 %v514
          %569 = vmatprep.subr.mxu0 0.0
          %570 = vmatpush1.msra.mxu0 %v515
          %571 = vmatprep.subr.mxu0 0.0
          %572 = vmatpush1.msra.mxu0 %v516
          %573 = vmatprep.subr.mxu0 0.0
          %574 = vmatpush1.msra.mxu0 %v517
          %575 = vmatprep.subr.mxu0 0.0
          %576 = vmatpush1.msra.mxu0 %v518
          %577 = vmatprep.subr.mxu0 0.0
          %578 = vmatpush1.msra.mxu0 %v519
          %579 = vmatprep.subr.mxu0 0.0
          %580 = vmatpush1.msra.mxu0 %v520
          %581 = vmatprep.subr.mxu0 0.0
          %582 = vmatpush1.msra.mxu0 %v521
          %583 = vmatprep.subr.mxu0 0.0
          %584 = vmatpush1.msra.mxu0 %v522
          %585 = vmatprep.subr.mxu0 0.0
          %586 = vmatpush1.msra.mxu0 %v523
          %587 = vmatprep.subr.mxu0 0.0
          %588 = vmatpush1.msra.mxu0 %v524
          %589 = vmatprep.mubr.f32.mxu0 %v462
          %590 = vmatmul.mubr.f32.gmra.mrb[0].mxu0 %v461
          %v591 = vpop.f32.mrb[0].mxu0
          %v592 = vadd.f32 0.0, %v591
          %v593 = vpop.f32.mrb[0].mxu0
          %594 = vmatprep.mubr.f32.mxu0 %v464
          %595 = vmatmul.mubr.f32.gmra.mrb[0].mxu0 %v463
          %v596 = vpop.f32.mrb[0].mxu0
          %v597 = vadd.f32 0.0, %v596
          %v598 = vpop.f32.mrb[0].mxu0
          %599 = vmatprep.mubr.f32.mxu0 %v466
          %600 = vmatmul.mubr.f32.gmra.mrb[0].mxu0 %v465
          %v601 = vpop.f32.mrb[0].mxu0
          %v602 = vadd.f32 0.0, %v601
          %v603 = vpop.f32.mrb[0].mxu0
          %604 = vmatprep.mubr.f32.mxu0 %v468
          %605 = vmatmul.mubr.f32.gmra.mrb[0].mxu0 %v467
          %v606 = vpop.f32.mrb[0].mxu0
          %v607 = vadd.f32 0.0, %v606
          %v608 = vpop.f32.mrb[0].mxu0
          %609 = vmatprep.mubr.f32.mxu0 %v470
          %610 = vmatmul.mubr.f32.gmra.mrb[0].mxu0 %v469
          %v611 = vpop.f32.mrb[0].mxu0
          %v612 = vadd.f32 0.0, %v611
          %v613 = vpop.f32.mrb[0].mxu0
          %614 = vmatprep.mubr.f32.mxu0 %v472
          %615 = vmatmul.mubr.f32.gmra.mrb[0].mxu0 %v471
          %v616 = vpop.f32.mrb[0].mxu0
          %v617 = vadd.f32 0.0, %v616
          %v618 = vpop.f32.mrb[0].mxu0
          %619 = vmatprep.mubr.f32.mxu0 %v474
          %620 = vmatmul.mubr.f32.gmra.mrb[0].mxu0 %v473
          %v621 = vpop.f32.mrb[0].mxu0
          %v622 = vadd.f32 0.0, %v621
          %v623 = vpop.f32.mrb[0].mxu0
          %624 = vmatprep.mubr.f32.mxu0 %v476
          %625 = vmatmul.mubr.f32.gmra.mrb[0].mxu0 %v475
          %v626 = vpop.f32.mrb[0].mxu0
          %v627 = vadd.f32 0.0, %v626
          %v628 = vpop.f32.mrb[0].mxu0
          %629 = vmatprep.mubr.f32.mxu0 %v478
          %630 = vmatmul.mubr.f32.gmra.mrb[0].mxu0 %v477
          %v631 = vpop.f32.mrb[0].mxu0
          %v632 = vadd.f32 0.0, %v631
          %v633 = vpop.f32.mrb[0].mxu0
          %634 = vmatprep.mubr.f32.mxu0 %v480
          %635 = vmatmul.mubr.f32.gmra.mrb[0].mxu0 %v479
          %v636 = vpop.f32.mrb[0].mxu0
          %v637 = vadd.f32 0.0, %v636
          %v638 = vpop.f32.mrb[0].mxu0
          %639 = vmatprep.mubr.f32.mxu0 %v482
          %640 = vmatmul.mubr.f32.gmra.mrb[0].mxu0 %v481
          %v641 = vpop.f32.mrb[0].mxu0
          %v642 = vadd.f32 0.0, %v641
          %v643 = vpop.f32.mrb[0].mxu0
          %644 = vmatprep.mubr.f32.mxu0 %v484
          %645 = vmatmul.mubr.f32.gmra.mrb[0].mxu0 %v483
          %v646 = vpop.f32.mrb[0].mxu0
          %v647 = vadd.f32 0.0, %v646
          %v648 = vpop.f32.mrb[0].mxu0
          %649 = vmatprep.mubr.f32.mxu0 %v486
          %650 = vmatmul.mubr.f32.gmra.mrb[0].mxu0 %v485
          %v651 = vpop.f32.mrb[0].mxu0
          %v652 = vadd.f32 0.0, %v651
          %v653 = vpop.f32.mrb[0].mxu0
          %654 = vmatprep.mubr.f32.mxu0 %v488
          %655 = vmatmul.mubr.f32.gmra.mrb[0].mxu0 %v487
          %v656 = vpop.f32.mrb[0].mxu0
          %v657 = vadd.f32 0.0, %v656
          %v658 = vpop.f32.mrb[0].mxu0
          %659 = vmatprep.mubr.f32.mxu0 %v490
          %660 = vmatmul.mubr.f32.gmra.mrb[0].mxu0 %v489
          %v661 = vpop.f32.mrb[0].mxu0
          %v662 = vadd.f32 0.0, %v661
          %v663 = vpop.f32.mrb[0].mxu0
          %664 = vmatprep.mubr.f32.mxu0 %v492
          %665 = vmatmul.mubr.f32.gmra.mrb[0].mxu0 %v491
          %v666 = vpop.f32.mrb[0].mxu0
          %v667 = vadd.f32 0.0, %v666
          %v668 = vpop.f32.mrb[0].mxu0
          %669 = vdwg.mxu0
          %v670 = vld [vmem:[#allocation9] sm:$0xff]
          %v671 = vld [vmem:[#allocation9 + $0x8] sm:$0xff]
          %s672 = scalar_lea.vmem [#allocation7], %s440
          %v673 = vld [vmem:[%s672] sm:$0xff]
          %v674 = vld [vmem:[%s672 + $0x8] sm:$0xff]
          %v675 = vld [vmem:[%s672 + $0x10] sm:$0xff]
          %v676 = vld [vmem:[%s672 + $0x18] sm:$0xff]
          %v677 = vld [vmem:[%s672 + $0x20] sm:$0xff]
          %v678 = vld [vmem:[%s672 + $0x28] sm:$0xff]
          %v679 = vld [vmem:[%s672 + $0x30] sm:$0xff]
          %v680 = vld [vmem:[%s672 + $0x38] sm:$0xff]
          %v681 = vld [vmem:[%s672 + $0x40] sm:$0xff]
          %v682 = vld [vmem:[%s672 + $0x48] sm:$0xff]
          %v683 = vld [vmem:[%s672 + $0x50] sm:$0xff]
          %v684 = vld [vmem:[%s672 + $0x58] sm:$0xff]
          %v685 = vld [vmem:[%s672 + $0x60] sm:$0xff]
          %v686 = vld [vmem:[%s672 + $0x68] sm:$0xff]
          %v687 = vld [vmem:[%s672 + $0x70] sm:$0xff]
          %v688 = vld [vmem:[%s672 + $0x78] sm:$0xff]
          %v689 = vld [vmem:[#allocation10] sm:$0xff]
          %v690 = vld [vmem:[#allocation10 + $0x8] sm:$0xff]
          %vm691 = vcmask 130048
          %v693 = vsel %vm691, %v673, 0
          %v696 = vsel %vm691, %v674, 0
          %v699 = vsel %vm691, %v675, 0
          %v702 = vsel %vm691, %v676, 0
          %v705 = vsel %vm691, %v677, 0
          %v708 = vsel %vm691, %v678, 0
          %v711 = vsel %vm691, %v679, 0
          %v714 = vsel %vm691, %v680, 0
          %v717 = vsel %vm691, %v681, 0
          %v720 = vsel %vm691, %v682, 0
          %v723 = vsel %vm691, %v683, 0
          %v726 = vsel %vm691, %v684, 0
          %v729 = vsel %vm691, %v685, 0
          %v732 = vsel %vm691, %v686, 0
          %v735 = vsel %vm691, %v687, 0
          %v738 = vsel %vm691, %v688, 0
          %740 = vmatprep.subr.mxu0 0.0
          %741 = vmatpush1.msra.mxu0 %v689
          %742 = vmatprep.subr.mxu0 0.0
          %743 = vmatpush1.msra.mxu0 %v690
          %744 = vmatprep.subr.mxu0 0.0
          %745 = vmatpush1.msra.mxu0 0.0
          %746 = vmatprep.subr.mxu0 0.0
          %747 = vmatpush1.msra.mxu0 0.0
          %748 = vmatprep.subr.mxu0 0.0
          %749 = vmatpush1.msra.mxu0 0.0
          %750 = vmatprep.subr.mxu0 0.0
          %751 = vmatpush1.msra.mxu0 0.0
          %752 = vmatprep.subr.mxu0 0.0
          %753 = vmatpush1.msra.mxu0 0.0
          %754 = vmatprep.subr.mxu0 0.0
          %755 = vmatpush1.msra.mxu0 0.0
          %756 = vmatprep.subr.mxu0 0.0
          %757 = vmatpush1.msra.mxu0 0.0
          %758 = vmatprep.subr.mxu0 0.0
          %759 = vmatpush1.msra.mxu0 0.0
          %760 = vmatprep.subr.mxu0 0.0
          %761 = vmatpush1.msra.mxu0 0.0
          %762 = vmatprep.subr.mxu0 0.0
          %763 = vmatpush1.msra.mxu0 0.0
          %764 = vmatprep.subr.mxu0 0.0
          %765 = vmatpush1.msra.mxu0 0.0
          %766 = vmatprep.subr.mxu0 0.0
          %767 = vmatpush1.msra.mxu0 0.0
          %768 = vmatprep.subr.mxu0 0.0
          %769 = vmatpush1.msra.mxu0 0.0
          %770 = vmatprep.subr.mxu0 0.0
          %771 = vmatpush1.msra.mxu0 0.0
          %772 = vmatprep.subr.mxu0 0.0
          %773 = vmatpush1.msra.mxu0 0.0
          %774 = vmatprep.subr.mxu0 0.0
          %775 = vmatpush1.msra.mxu0 0.0
          %776 = vmatprep.subr.mxu0 0.0
          %777 = vmatpush1.msra.mxu0 0.0
          %778 = vmatprep.subr.mxu0 0.0
          %779 = vmatpush1.msra.mxu0 0.0
          %780 = vmatprep.subr.mxu0 0.0
          %781 = vmatpush1.msra.mxu0 0.0
          %782 = vmatprep.subr.mxu0 0.0
          %783 = vmatpush1.msra.mxu0 0.0
          %784 = vmatprep.subr.mxu0 0.0
          %785 = vmatpush1.msra.mxu0 0.0
          %786 = vmatprep.subr.mxu0 0.0
          %787 = vmatpush1.msra.mxu0 0.0
          %788 = vmatprep.subr.mxu0 0.0
          %789 = vmatpush1.msra.mxu0 0.0
          %790 = vmatprep.subr.mxu0 0.0
          %791 = vmatpush1.msra.mxu0 0.0
          %792 = vmatprep.subr.mxu0 0.0
          %793 = vmatpush1.msra.mxu0 0.0
          %794 = vmatprep.subr.mxu0 0.0
          %795 = vmatpush1.msra.mxu0 0.0
          %796 = vmatprep.subr.mxu0 0.0
          %797 = vmatpush1.msra.mxu0 0.0
          %798 = vmatprep.subr.mxu0 0.0
          %799 = vmatpush1.msra.mxu0 0.0
          %800 = vmatprep.subr.mxu0 0.0
          %801 = vmatpush1.msra.mxu0 0.0
          %802 = vmatprep.subr.mxu0 0.0
          %803 = vmatpush1.msra.mxu0 0.0
          %804 = vmatprep.mubr.f32.mxu0 0.0
          %805 = vmatmul.mubr.f32.gmra.mrb[0].mxu0 %v693
          %v806 = vpop.f32.mrb[0].mxu0
          %v807 = vadd.f32 0.0, %v806
          %v808 = vpop.f32.mrb[0].mxu0
          %809 = vmatprep.mubr.f32.mxu0 0.0
          %810 = vmatmul.mubr.f32.gmra.mrb[0].mxu0 %v696
          %v811 = vpop.f32.mrb[0].mxu0
          %v812 = vadd.f32 0.0, %v811
          %v813 = vpop.f32.mrb[0].mxu0
          %814 = vmatprep.mubr.f32.mxu0 0.0
          %815 = vmatmul.mubr.f32.gmra.mrb[0].mxu0 %v699
          %v816 = vpop.f32.mrb[0].mxu0
          %v817 = vadd.f32 0.0, %v816
          %v818 = vpop.f32.mrb[0].mxu0
          %819 = vmatprep.mubr.f32.mxu0 0.0
          %820 = vmatmul.mubr.f32.gmra.mrb[0].mxu0 %v702
          %v821 = vpop.f32.mrb[0].mxu0
          %v822 = vadd.f32 0.0, %v821
          %v823 = vpop.f32.mrb[0].mxu0
          %824 = vmatprep.mubr.f32.mxu0 0.0
          %825 = vmatmul.mubr.f32.gmra.mrb[0].mxu0 %v705
          %v826 = vpop.f32.mrb[0].mxu0
          %v827 = vadd.f32 0.0, %v826
          %v828 = vpop.f32.mrb[0].mxu0
          %829 = vmatprep.mubr.f32.mxu0 0.0
          %830 = vmatmul.mubr.f32.gmra.mrb[0].mxu0 %v708
          %v831 = vpop.f32.mrb[0].mxu0
          %v832 = vadd.f32 0.0, %v831
          %v833 = vpop.f32.mrb[0].mxu0
          %834 = vmatprep.mubr.f32.mxu0 0.0
          %835 = vmatmul.mubr.f32.gmra.mrb[0].mxu0 %v711
          %v836 = vpop.f32.mrb[0].mxu0
          %v837 = vadd.f32 0.0, %v836
          %v838 = vpop.f32.mrb[0].mxu0
          %839 = vmatprep.mubr.f32.mxu0 0.0
          %840 = vmatmul.mubr.f32.gmra.mrb[0].mxu0 %v714
          %v841 = vpop.f32.mrb[0].mxu0
          %v842 = vadd.f32 0.0, %v841
          %v843 = vpop.f32.mrb[0].mxu0
          %844 = vmatprep.mubr.f32.mxu0 0.0
          %845 = vmatmul.mubr.f32.gmra.mrb[0].mxu0 %v717
          %v846 = vpop.f32.mrb[0].mxu0
          %v847 = vadd.f32 0.0, %v846
          %v848 = vpop.f32.mrb[0].mxu0
          %849 = vmatprep.mubr.f32.mxu0 0.0
          %850 = vmatmul.mubr.f32.gmra.mrb[0].mxu0 %v720
          %v851 = vpop.f32.mrb[0].mxu0
          %v852 = vadd.f32 0.0, %v851
          %v853 = vpop.f32.mrb[0].mxu0
          %854 = vmatprep.mubr.f32.mxu0 0.0
          %855 = vmatmul.mubr.f32.gmra.mrb[0].mxu0 %v723
          %v856 = vpop.f32.mrb[0].mxu0
          %v857 = vadd.f32 0.0, %v856
          %v858 = vpop.f32.mrb[0].mxu0
          %859 = vmatprep.mubr.f32.mxu0 0.0
          %860 = vmatmul.mubr.f32.gmra.mrb[0].mxu0 %v726
          %v861 = vpop.f32.mrb[0].mxu0
          %v862 = vadd.f32 0.0, %v861
          %v863 = vpop.f32.mrb[0].mxu0
          %864 = vmatprep.mubr.f32.mxu0 0.0
          %865 = vmatmul.mubr.f32.gmra.mrb[0].mxu0 %v729
          %v866 = vpop.f32.mrb[0].mxu0
          %v867 = vadd.f32 0.0, %v866
          %v868 = vpop.f32.mrb[0].mxu0
          %869 = vmatprep.mubr.f32.mxu0 0.0
          %870 = vmatmul.mubr.f32.gmra.mrb[0].mxu0 %v732
          %v871 = vpop.f32.mrb[0].mxu0
          %v872 = vadd.f32 0.0, %v871
          %v873 = vpop.f32.mrb[0].mxu0
          %874 = vmatprep.mubr.f32.mxu0 0.0
          %875 = vmatmul.mubr.f32.gmra.mrb[0].mxu0 %v735
          %v876 = vpop.f32.mrb[0].mxu0
          %v877 = vadd.f32 0.0, %v876
          %v878 = vpop.f32.mrb[0].mxu0
          %879 = vmatprep.mubr.f32.mxu0 0.0
          %880 = vmatmul.mubr.f32.gmra.mrb[0].mxu0 %v738
          %v881 = vpop.f32.mrb[0].mxu0
          %v882 = vadd.f32 0.0, %v881
          %v883 = vpop.f32.mrb[0].mxu0
          %884 = vdwg.mxu0
          %v886 = vsel %vm691, %v592, 0
          %v889 = vsel %vm691, %v597, 0
          %v892 = vsel %vm691, %v602, 0
          %v895 = vsel %vm691, %v607, 0
          %v898 = vsel %vm691, %v612, 0
          %v901 = vsel %vm691, %v617, 0
          %v904 = vsel %vm691, %v622, 0
          %v907 = vsel %vm691, %v627, 0
          %v910 = vsel %vm691, %v632, 0
          %v913 = vsel %vm691, %v637, 0
          %v916 = vsel %vm691, %v642, 0
          %v919 = vsel %vm691, %v647, 0
          %v922 = vsel %vm691, %v652, 0
          %v925 = vsel %vm691, %v657, 0
          %v928 = vsel %vm691, %v662, 0
          %v931 = vsel %vm691, %v667, 0
          %933 = vmatprep.subr.mxu0 0.0
          %934 = vmatpush1.msra.mxu0 %v670
          %935 = vmatprep.subr.mxu0 0.0
          %936 = vmatpush1.msra.mxu0 %v671
          %937 = vmatprep.subr.mxu0 0.0
          %938 = vmatpush1.msra.mxu0 0.0
          %939 = vmatprep.subr.mxu0 0.0
          %940 = vmatpush1.msra.mxu0 0.0
          %941 = vmatprep.subr.mxu0 0.0
          %942 = vmatpush1.msra.mxu0 0.0
          %943 = vmatprep.subr.mxu0 0.0
          %944 = vmatpush1.msra.mxu0 0.0
          %945 = vmatprep.subr.mxu0 0.0
          %946 = vmatpush1.msra.mxu0 0.0
          %947 = vmatprep.subr.mxu0 0.0
          %948 = vmatpush1.msra.mxu0 0.0
          %949 = vmatprep.subr.mxu0 0.0
          %950 = vmatpush1.msra.mxu0 0.0
          %951 = vmatprep.subr.mxu0 0.0
          %952 = vmatpush1.msra.mxu0 0.0
          %953 = vmatprep.subr.mxu0 0.0
          %954 = vmatpush1.msra.mxu0 0.0
          %955 = vmatprep.subr.mxu0 0.0
          %956 = vmatpush1.msra.mxu0 0.0
          %957 = vmatprep.subr.mxu0 0.0
          %958 = vmatpush1.msra.mxu0 0.0
          %959 = vmatprep.subr.mxu0 0.0
          %960 = vmatpush1.msra.mxu0 0.0
          %961 = vmatprep.subr.mxu0 0.0
          %962 = vmatpush1.msra.mxu0 0.0
          %963 = vmatprep.subr.mxu0 0.0
          %964 = vmatpush1.msra.mxu0 0.0
          %965 = vmatprep.subr.mxu0 0.0
          %966 = vmatpush1.msra.mxu0 0.0
          %967 = vmatprep.subr.mxu0 0.0
          %968 = vmatpush1.msra.mxu0 0.0
          %969 = vmatprep.subr.mxu0 0.0
          %970 = vmatpush1.msra.mxu0 0.0
          %971 = vmatprep.subr.mxu0 0.0
          %972 = vmatpush1.msra.mxu0 0.0
          %973 = vmatprep.subr.mxu0 0.0
          %974 = vmatpush1.msra.mxu0 0.0
          %975 = vmatprep.subr.mxu0 0.0
          %976 = vmatpush1.msra.mxu0 0.0
          %977 = vmatprep.subr.mxu0 0.0
          %978 = vmatpush1.msra.mxu0 0.0
          %979 = vmatprep.subr.mxu0 0.0
          %980 = vmatpush1.msra.mxu0 0.0
          %981 = vmatprep.subr.mxu0 0.0
          %982 = vmatpush1.msra.mxu0 0.0
          %983 = vmatprep.subr.mxu0 0.0
          %984 = vmatpush1.msra.mxu0 0.0
          %985 = vmatprep.subr.mxu0 0.0
          %986 = vmatpush1.msra.mxu0 0.0
          %987 = vmatprep.subr.mxu0 0.0
          %988 = vmatpush1.msra.mxu0 0.0
          %989 = vmatprep.subr.mxu0 0.0
          %990 = vmatpush1.msra.mxu0 0.0
          %991 = vmatprep.subr.mxu0 0.0
          %992 = vmatpush1.msra.mxu0 0.0
          %993 = vmatprep.subr.mxu0 0.0
          %994 = vmatpush1.msra.mxu0 0.0
          %995 = vmatprep.subr.mxu0 0.0
          %996 = vmatpush1.msra.mxu0 0.0
          %997 = vmatprep.mubr.f32.mxu0 0.0
          %998 = vmatmul.mubr.f32.gmra.mrb[0].mxu0 %v886
          %v999 = vpop.f32.mrb[0].mxu0
          %v1000 = vadd.f32 %v807, %v999
          %v1001 = vpop.f32.mrb[0].mxu0
          %1002 = vmatprep.mubr.f32.mxu0 0.0
          %1003 = vmatmul.mubr.f32.gmra.mrb[0].mxu0 %v889
          %v1004 = vpop.f32.mrb[0].mxu0
          %v1005 = vadd.f32 %v812, %v1004
          %v1006 = vpop.f32.mrb[0].mxu0
          %1007 = vmatprep.mubr.f32.mxu0 0.0
          %1008 = vmatmul.mubr.f32.gmra.mrb[0].mxu0 %v892
          %v1009 = vpop.f32.mrb[0].mxu0
          %v1010 = vadd.f32 %v817, %v1009
          %v1011 = vpop.f32.mrb[0].mxu0
          %1012 = vmatprep.mubr.f32.mxu0 0.0
          %1013 = vmatmul.mubr.f32.gmra.mrb[0].mxu0 %v895
          %v1014 = vpop.f32.mrb[0].mxu0
          %v1015 = vadd.f32 %v822, %v1014
          %v1016 = vpop.f32.mrb[0].mxu0
          %1017 = vmatprep.mubr.f32.mxu0 0.0
          %1018 = vmatmul.mubr.f32.gmra.mrb[0].mxu0 %v898
          %v1019 = vpop.f32.mrb[0].mxu0
          %v1020 = vadd.f32 %v827, %v1019
          %v1021 = vpop.f32.mrb[0].mxu0
          %1022 = vmatprep.mubr.f32.mxu0 0.0
          %1023 = vmatmul.mubr.f32.gmra.mrb[0].mxu0 %v901
          %v1024 = vpop.f32.mrb[0].mxu0
          %v1025 = vadd.f32 %v832, %v1024
          %v1026 = vpop.f32.mrb[0].mxu0
          %1027 = vmatprep.mubr.f32.mxu0 0.0
          %1028 = vmatmul.mubr.f32.gmra.mrb[0].mxu0 %v904
          %v1029 = vpop.f32.mrb[0].mxu0
          %v1030 = vadd.f32 %v837, %v1029
          %v1031 = vpop.f32.mrb[0].mxu0
          %1032 = vmatprep.mubr.f32.mxu0 0.0
          %1033 = vmatmul.mubr.f32.gmra.mrb[0].mxu0 %v907
          %v1034 = vpop.f32.mrb[0].mxu0
          %v1035 = vadd.f32 %v842, %v1034
          %v1036 = vpop.f32.mrb[0].mxu0
          %1037 = vmatprep.mubr.f32.mxu0 0.0
          %1038 = vmatmul.mubr.f32.gmra.mrb[0].mxu0 %v910
          %v1039 = vpop.f32.mrb[0].mxu0
          %v1040 = vadd.f32 %v847, %v1039
          %v1041 = vpop.f32.mrb[0].mxu0
          %1042 = vmatprep.mubr.f32.mxu0 0.0
          %1043 = vmatmul.mubr.f32.gmra.mrb[0].mxu0 %v913
          %v1044 = vpop.f32.mrb[0].mxu0
          %v1045 = vadd.f32 %v852, %v1044
          %v1046 = vpop.f32.mrb[0].mxu0
          %1047 = vmatprep.mubr.f32.mxu0 0.0
          %1048 = vmatmul.mubr.f32.gmra.mrb[0].mxu0 %v916
          %v1049 = vpop.f32.mrb[0].mxu0
          %v1050 = vadd.f32 %v857, %v1049
          %v1051 = vpop.f32.mrb[0].mxu0
          %1052 = vmatprep.mubr.f32.mxu0 0.0
          %1053 = vmatmul.mubr.f32.gmra.mrb[0].mxu0 %v919
          %v1054 = vpop.f32.mrb[0].mxu0
          %v1055 = vadd.f32 %v862, %v1054
          %v1056 = vpop.f32.mrb[0].mxu0
          %1057 = vmatprep.mubr.f32.mxu0 0.0
          %1058 = vmatmul.mubr.f32.gmra.mrb[0].mxu0 %v922
          %v1059 = vpop.f32.mrb[0].mxu0
          %v1060 = vadd.f32 %v867, %v1059
          %v1061 = vpop.f32.mrb[0].mxu0
          %1062 = vmatprep.mubr.f32.mxu0 0.0
          %1063 = vmatmul.mubr.f32.gmra.mrb[0].mxu0 %v925
          %v1064 = vpop.f32.mrb[0].mxu0
          %v1065 = vadd.f32 %v872, %v1064
          %v1066 = vpop.f32.mrb[0].mxu0
          %1067 = vmatprep.mubr.f32.mxu0 0.0
          %1068 = vmatmul.mubr.f32.gmra.mrb[0].mxu0 %v928
          %v1069 = vpop.f32.mrb[0].mxu0
          %v1070 = vadd.f32 %v877, %v1069
          %v1071 = vpop.f32.mrb[0].mxu0
          %1072 = vmatprep.mubr.f32.mxu0 0.0
          %1073 = vmatmul.mubr.f32.gmra.mrb[0].mxu0 %v931
          %v1074 = vpop.f32.mrb[0].mxu0
          %v1075 = vadd.f32 %v882, %v1074
          %v1076 = vpop.f32.mrb[0].mxu0
          %1077 = vdwg.mxu0
          %v1078 = vld [vmem:[#allocation12] sm:$0x1]
          %v1080 = vlaneseq
          %v1081 = vshrl.u32 %v1080, 7
          %v1082 = vsub.s32 0, %v1081
          %v1083 = vrot.slane %v1078, %v1082
          %v1085 = vadd.f32 %v1000, %v1083
          %v1086 = vadd.f32 %v1005, %v1083
          %v1087 = vadd.f32 %v1010, %v1083
          %v1088 = vadd.f32 %v1015, %v1083
          %v1089 = vadd.f32 %v1020, %v1083
          %v1090 = vadd.f32 %v1025, %v1083
          %v1091 = vadd.f32 %v1030, %v1083
          %v1092 = vadd.f32 %v1035, %v1083
          %v1093 = vadd.f32 %v1040, %v1083
          %v1094 = vadd.f32 %v1045, %v1083
          %v1095 = vadd.f32 %v1050, %v1083
          %v1096 = vadd.f32 %v1055, %v1083
          %v1097 = vadd.f32 %v1060, %v1083
          %v1098 = vadd.f32 %v1065, %v1083
          %v1099 = vadd.f32 %v1070, %v1083
          %v1100 = vadd.f32 %v1075, %v1083
          %v1101 = vmax.f32 %v1085, 0.0
          %v1102 = vmax.f32 %v1086, 0.0
          %v1103 = vmax.f32 %v1087, 0.0
          %v1104 = vmax.f32 %v1088, 0.0
          %v1105 = vmax.f32 %v1089, 0.0
          %v1106 = vmax.f32 %v1090, 0.0
          %v1107 = vmax.f32 %v1091, 0.0
          %v1108 = vmax.f32 %v1092, 0.0
          %v1109 = vmax.f32 %v1093, 0.0
          %v1110 = vmax.f32 %v1094, 0.0
          %v1111 = vmax.f32 %v1095, 0.0
          %v1112 = vmax.f32 %v1096, 0.0
          %v1113 = vmax.f32 %v1097, 0.0
          %v1114 = vmax.f32 %v1098, 0.0
          %v1115 = vmax.f32 %v1099, 0.0
          %v1116 = vmax.f32 %v1100, 0.0
          %v1117 = vld [vmem:[#allocation13] sm:$0xff]
          %v1118 = vld [vmem:[#allocation13 + $0x8] sm:$0xff]
          %v1119 = vld [vmem:[#allocation13 + $0x10] sm:$0xff]
          %v1120 = vld [vmem:[#allocation13 + $0x18] sm:$0xff]
          %v1121 = vld [vmem:[#allocation13 + $0x20] sm:$0xff]
          %v1122 = vld [vmem:[#allocation13 + $0x28] sm:$0xff]
          %v1123 = vld [vmem:[#allocation13 + $0x30] sm:$0xff]
          %v1124 = vld [vmem:[#allocation13 + $0x38] sm:$0xff]
          %vm1125 = vcmask 523264
          %v1127 = vsel %vm1125, %v1101, 0
          %v1130 = vsel %vm1125, %v1102, 0
          %v1133 = vsel %vm1125, %v1103, 0
          %v1136 = vsel %vm1125, %v1104, 0
          %v1139 = vsel %vm1125, %v1105, 0
          %v1142 = vsel %vm1125, %v1106, 0
          %v1145 = vsel %vm1125, %v1107, 0
          %v1148 = vsel %vm1125, %v1108, 0
          %v1151 = vsel %vm1125, %v1109, 0
          %v1154 = vsel %vm1125, %v1110, 0
          %v1157 = vsel %vm1125, %v1111, 0
          %v1160 = vsel %vm1125, %v1112, 0
          %v1163 = vsel %vm1125, %v1113, 0
          %v1166 = vsel %vm1125, %v1114, 0
          %v1169 = vsel %vm1125, %v1115, 0
          %v1172 = vsel %vm1125, %v1116, 0
          %1174 = vmatprep.subr.mxu0 0.0
          %1175 = vmatpush1.msra.mxu0 %v1117
          %1176 = vmatprep.subr.mxu0 0.0
          %1177 = vmatpush1.msra.mxu0 %v1118
          %1178 = vmatprep.subr.mxu0 0.0
          %1179 = vmatpush1.msra.mxu0 %v1119
          %1180 = vmatprep.subr.mxu0 0.0
          %1181 = vmatpush1.msra.mxu0 %v1120
          %1182 = vmatprep.subr.mxu0 0.0
          %1183 = vmatpush1.msra.mxu0 %v1121
          %1184 = vmatprep.subr.mxu0 0.0
          %1185 = vmatpush1.msra.mxu0 %v1122
          %1186 = vmatprep.subr.mxu0 0.0
          %1187 = vmatpush1.msra.mxu0 %v1123
          %1188 = vmatprep.subr.mxu0 0.0
          %1189 = vmatpush1.msra.mxu0 %v1124
          %1190 = vmatprep.subr.mxu0 0.0
          %1191 = vmatpush1.msra.mxu0 0.0
          %1192 = vmatprep.subr.mxu0 0.0
          %1193 = vmatpush1.msra.mxu0 0.0
          %1194 = vmatprep.subr.mxu0 0.0
          %1195 = vmatpush1.msra.mxu0 0.0
          %1196 = vmatprep.subr.mxu0 0.0
          %1197 = vmatpush1.msra.mxu0 0.0
          %1198 = vmatprep.subr.mxu0 0.0
          %1199 = vmatpush1.msra.mxu0 0.0
          %1200 = vmatprep.subr.mxu0 0.0
          %1201 = vmatpush1.msra.mxu0 0.0
          %1202 = vmatprep.subr.mxu0 0.0
          %1203 = vmatpush1.msra.mxu0 0.0
          %1204 = vmatprep.subr.mxu0 0.0
          %1205 = vmatpush1.msra.mxu0 0.0
          %1206 = vmatprep.subr.mxu0 0.0
          %1207 = vmatpush1.msra.mxu0 0.0
          %1208 = vmatprep.subr.mxu0 0.0
          %1209 = vmatpush1.msra.mxu0 0.0
          %1210 = vmatprep.subr.mxu0 0.0
          %1211 = vmatpush1.msra.mxu0 0.0
          %1212 = vmatprep.subr.mxu0 0.0
          %1213 = vmatpush1.msra.mxu0 0.0
          %1214 = vmatprep.subr.mxu0 0.0
          %1215 = vmatpush1.msra.mxu0 0.0
          %1216 = vmatprep.subr.mxu0 0.0
          %1217 = vmatpush1.msra.mxu0 0.0
          %1218 = vmatprep.subr.mxu0 0.0
          %1219 = vmatpush1.msra.mxu0 0.0
          %1220 = vmatprep.subr.mxu0 0.0
          %1221 = vmatpush1.msra.mxu0 0.0
          %1222 = vmatprep.subr.mxu0 0.0
          %1223 = vmatpush1.msra.mxu0 0.0
          %1224 = vmatprep.subr.mxu0 0.0
          %1225 = vmatpush1.msra.mxu0 0.0
          %1226 = vmatprep.subr.mxu0 0.0
          %1227 = vmatpush1.msra.mxu0 0.0
          %1228 = vmatprep.subr.mxu0 0.0
          %1229 = vmatpush1.msra.mxu0 0.0
          %1230 = vmatprep.subr.mxu0 0.0
          %1231 = vmatpush1.msra.mxu0 0.0
          %1232 = vmatprep.subr.mxu0 0.0
          %1233 = vmatpush1.msra.mxu0 0.0
          %1234 = vmatprep.subr.mxu0 0.0
          %1235 = vmatpush1.msra.mxu0 0.0
          %1236 = vmatprep.subr.mxu0 0.0
          %1237 = vmatpush1.msra.mxu0 0.0
          %1238 = vmatprep.mubr.f32.mxu0 0.0
          %1239 = vmatmul.mubr.f32.gmra.mrb[0].mxu0 %v1127
          %v1240 = vpop.f32.mrb[0].mxu0
          %v1241 = vadd.f32 0.0, %v1240
          %v1242 = vpop.f32.mrb[0].mxu0
          %1243 = vmatprep.mubr.f32.mxu0 0.0
          %1244 = vmatmul.mubr.f32.gmra.mrb[0].mxu0 %v1130
          %v1245 = vpop.f32.mrb[0].mxu0
          %v1246 = vadd.f32 0.0, %v1245
          %v1247 = vpop.f32.mrb[0].mxu0
          %1248 = vmatprep.mubr.f32.mxu0 0.0
          %1249 = vmatmul.mubr.f32.gmra.mrb[0].mxu0 %v1133
          %v1250 = vpop.f32.mrb[0].mxu0
          %v1251 = vadd.f32 0.0, %v1250
          %v1252 = vpop.f32.mrb[0].mxu0
          %1253 = vmatprep.mubr.f32.mxu0 0.0
          %1254 = vmatmul.mubr.f32.gmra.mrb[0].mxu0 %v1136
          %v1255 = vpop.f32.mrb[0].mxu0
          %v1256 = vadd.f32 0.0, %v1255
          %v1257 = vpop.f32.mrb[0].mxu0
          %1258 = vmatprep.mubr.f32.mxu0 0.0
          %1259 = vmatmul.mubr.f32.gmra.mrb[0].mxu0 %v1139
          %v1260 = vpop.f32.mrb[0].mxu0
          %v1261 = vadd.f32 0.0, %v1260
          %v1262 = vpop.f32.mrb[0].mxu0
          %1263 = vmatprep.mubr.f32.mxu0 0.0
          %1264 = vmatmul.mubr.f32.gmra.mrb[0].mxu0 %v1142
          %v1265 = vpop.f32.mrb[0].mxu0
          %v1266 = vadd.f32 0.0, %v1265
          %v1267 = vpop.f32.mrb[0].mxu0
          %1268 = vmatprep.mubr.f32.mxu0 0.0
          %1269 = vmatmul.mubr.f32.gmra.mrb[0].mxu0 %v1145
          %v1270 = vpop.f32.mrb[0].mxu0
          %v1271 = vadd.f32 0.0, %v1270
          %v1272 = vpop.f32.mrb[0].mxu0
          %1273 = vmatprep.mubr.f32.mxu0 0.0
          %1274 = vmatmul.mubr.f32.gmra.mrb[0].mxu0 %v1148
          %v1275 = vpop.f32.mrb[0].mxu0
          %v1276 = vadd.f32 0.0, %v1275
          %v1277 = vpop.f32.mrb[0].mxu0
          %1278 = vmatprep.mubr.f32.mxu0 0.0
          %1279 = vmatmul.mubr.f32.gmra.mrb[0].mxu0 %v1151
          %v1280 = vpop.f32.mrb[0].mxu0
          %v1281 = vadd.f32 0.0, %v1280
          %v1282 = vpop.f32.mrb[0].mxu0
          %1283 = vmatprep.mubr.f32.mxu0 0.0
          %1284 = vmatmul.mubr.f32.gmra.mrb[0].mxu0 %v1154
          %v1285 = vpop.f32.mrb[0].mxu0
          %v1286 = vadd.f32 0.0, %v1285
          %v1287 = vpop.f32.mrb[0].mxu0
          %1288 = vmatprep.mubr.f32.mxu0 0.0
          %1289 = vmatmul.mubr.f32.gmra.mrb[0].mxu0 %v1157
          %v1290 = vpop.f32.mrb[0].mxu0
          %v1291 = vadd.f32 0.0, %v1290
          %v1292 = vpop.f32.mrb[0].mxu0
          %1293 = vmatprep.mubr.f32.mxu0 0.0
          %1294 = vmatmul.mubr.f32.gmra.mrb[0].mxu0 %v1160
          %v1295 = vpop.f32.mrb[0].mxu0
          %v1296 = vadd.f32 0.0, %v1295
          %v1297 = vpop.f32.mrb[0].mxu0
          %1298 = vmatprep.mubr.f32.mxu0 0.0
          %1299 = vmatmul.mubr.f32.gmra.mrb[0].mxu0 %v1163
          %v1300 = vpop.f32.mrb[0].mxu0
          %v1301 = vadd.f32 0.0, %v1300
          %v1302 = vpop.f32.mrb[0].mxu0
          %1303 = vmatprep.mubr.f32.mxu0 0.0
          %1304 = vmatmul.mubr.f32.gmra.mrb[0].mxu0 %v1166
          %v1305 = vpop.f32.mrb[0].mxu0
          %v1306 = vadd.f32 0.0, %v1305
          %v1307 = vpop.f32.mrb[0].mxu0
          %1308 = vmatprep.mubr.f32.mxu0 0.0
          %1309 = vmatmul.mubr.f32.gmra.mrb[0].mxu0 %v1169
          %v1310 = vpop.f32.mrb[0].mxu0
          %v1311 = vadd.f32 0.0, %v1310
          %v1312 = vpop.f32.mrb[0].mxu0
          %1313 = vmatprep.mubr.f32.mxu0 0.0
          %1314 = vmatmul.mubr.f32.gmra.mrb[0].mxu0 %v1172
          %v1315 = vpop.f32.mrb[0].mxu0
          %v1316 = vadd.f32 0.0, %v1315
          %v1317 = vpop.f32.mrb[0].mxu0
          %1318 = vdwg.mxu0
          %s1319 = scalar_lea.vmem [#allocation2], %s440
          %1320 = vst [vmem:[%s1319] sm:$0xff] %v1241
          %1321 = vst [vmem:[%s1319 + $0x8] sm:$0xff] %v1246
          %1322 = vst [vmem:[%s1319 + $0x10] sm:$0xff] %v1251
          %1323 = vst [vmem:[%s1319 + $0x18] sm:$0xff] %v1256
          %1324 = vst [vmem:[%s1319 + $0x20] sm:$0xff] %v1261
          %1325 = vst [vmem:[%s1319 + $0x28] sm:$0xff] %v1266
          %1326 = vst [vmem:[%s1319 + $0x30] sm:$0xff] %v1271
          %1327 = vst [vmem:[%s1319 + $0x38] sm:$0xff] %v1276
          %1328 = vst [vmem:[%s1319 + $0x40] sm:$0xff] %v1281
          %1329 = vst [vmem:[%s1319 + $0x48] sm:$0xff] %v1286
          %1330 = vst [vmem:[%s1319 + $0x50] sm:$0xff] %v1291
          %1331 = vst [vmem:[%s1319 + $0x58] sm:$0xff] %v1296
          %1332 = vst [vmem:[%s1319 + $0x60] sm:$0xff] %v1301
          %1333 = vst [vmem:[%s1319 + $0x68] sm:$0xff] %v1306
          %1334 = vst [vmem:[%s1319 + $0x70] sm:$0xff] %v1311
          %1335 = vst [vmem:[%s1319 + $0x78] sm:$0xff] %v1316
          %v1336 = vld [vmem:[#allocation15] sm:$0xff]
          %v1337 = vld [vmem:[#allocation15 + $0x8] sm:$0xff]
          %v1338 = vld [vmem:[#allocation15 + $0x10] sm:$0xff]
          %v1339 = vld [vmem:[#allocation15 + $0x18] sm:$0xff]
          %v1340 = vld [vmem:[#allocation15 + $0x20] sm:$0xff]
          %v1341 = vld [vmem:[#allocation15 + $0x28] sm:$0xff]
          %v1342 = vld [vmem:[#allocation15 + $0x30] sm:$0xff]
          %v1343 = vld [vmem:[#allocation15 + $0x38] sm:$0xff]
          %v1344 = vld [vmem:[#allocation16] sm:$0x1]
          %v1346 = vlaneseq
          %v1347 = vshrl.u32 %v1346, 7
          %v1348 = vsub.s32 0, %v1347
          %v1349 = vrot.slane %v1344, %v1348
          %1351 = vmatprep.subr.mxu0 0.0
          %1352 = vmatpush1.msra.mxu0 %v1336
          %1353 = vmatprep.subr.mxu0 0.0
          %1354 = vmatpush1.msra.mxu0 %v1337
          %1355 = vmatprep.subr.mxu0 0.0
          %1356 = vmatpush1.msra.mxu0 %v1338
          %1357 = vmatprep.subr.mxu0 0.0
          %1358 = vmatpush1.msra.mxu0 %v1339
          %1359 = vmatprep.subr.mxu0 0.0
          %1360 = vmatpush1.msra.mxu0 %v1340
          %1361 = vmatprep.subr.mxu0 0.0
          %1362 = vmatpush1.msra.mxu0 %v1341
          %1363 = vmatprep.subr.mxu0 0.0
          %1364 = vmatpush1.msra.mxu0 %v1342
          %1365 = vmatprep.subr.mxu0 0.0
          %1366 = vmatpush1.msra.mxu0 %v1343
          %1367 = vmatprep.subr.mxu0 0.0
          %1368 = vmatpush1.msra.mxu0 0.0
          %1369 = vmatprep.subr.mxu0 0.0
          %1370 = vmatpush1.msra.mxu0 0.0
          %1371 = vmatprep.subr.mxu0 0.0
          %1372 = vmatpush1.msra.mxu0 0.0
          %1373 = vmatprep.subr.mxu0 0.0
          %1374 = vmatpush1.msra.mxu0 0.0
          %1375 = vmatprep.subr.mxu0 0.0
          %1376 = vmatpush1.msra.mxu0 0.0
          %1377 = vmatprep.subr.mxu0 0.0
          %1378 = vmatpush1.msra.mxu0 0.0
          %1379 = vmatprep.subr.mxu0 0.0
          %1380 = vmatpush1.msra.mxu0 0.0
          %1381 = vmatprep.subr.mxu0 0.0
          %1382 = vmatpush1.msra.mxu0 0.0
          %1383 = vmatprep.subr.mxu0 0.0
          %1384 = vmatpush1.msra.mxu0 0.0
          %1385 = vmatprep.subr.mxu0 0.0
          %1386 = vmatpush1.msra.mxu0 0.0
          %1387 = vmatprep.subr.mxu0 0.0
          %1388 = vmatpush1.msra.mxu0 0.0
          %1389 = vmatprep.subr.mxu0 0.0
          %1390 = vmatpush1.msra.mxu0 0.0
          %1391 = vmatprep.subr.mxu0 0.0
          %1392 = vmatpush1.msra.mxu0 0.0
          %1393 = vmatprep.subr.mxu0 0.0
          %1394 = vmatpush1.msra.mxu0 0.0
          %1395 = vmatprep.subr.mxu0 0.0
          %1396 = vmatpush1.msra.mxu0 0.0
          %1397 = vmatprep.subr.mxu0 0.0
          %1398 = vmatpush1.msra.mxu0 0.0
          %1399 = vmatprep.subr.mxu0 0.0
          %1400 = vmatpush1.msra.mxu0 0.0
          %1401 = vmatprep.subr.mxu0 0.0
          %1402 = vmatpush1.msra.mxu0 0.0
          %1403 = vmatprep.subr.mxu0 0.0
          %1404 = vmatpush1.msra.mxu0 0.0
          %1405 = vmatprep.subr.mxu0 0.0
          %1406 = vmatpush1.msra.mxu0 0.0
          %1407 = vmatprep.subr.mxu0 0.0
          %1408 = vmatpush1.msra.mxu0 0.0
          %1409 = vmatprep.subr.mxu0 0.0
          %1410 = vmatpush1.msra.mxu0 0.0
          %1411 = vmatprep.subr.mxu0 0.0
          %1412 = vmatpush1.msra.mxu0 0.0
          %1413 = vmatprep.subr.mxu0 0.0
          %1414 = vmatpush1.msra.mxu0 0.0
          %1415 = vmatprep.mubr.f32.mxu0 0.0
          %1416 = vmatmul.mubr.f32.gmra.mrb[0].mxu0 %v1127
          %v1417 = vpop.f32.mrb[0].mxu0
          %v1418 = vadd.f32 %v1349, %v1417
          %v1419 = vpop.f32.mrb[0].mxu0
          %1420 = vmatprep.mubr.f32.mxu0 0.0
          %1421 = vmatmul.mubr.f32.gmra.mrb[0].mxu0 %v1130
          %v1422 = vpop.f32.mrb[0].mxu0
          %v1423 = vadd.f32 %v1349, %v1422
          %v1424 = vpop.f32.mrb[0].mxu0
          %1425 = vmatprep.mubr.f32.mxu0 0.0
          %1426 = vmatmul.mubr.f32.gmra.mrb[0].mxu0 %v1133
          %v1427 = vpop.f32.mrb[0].mxu0
          %v1428 = vadd.f32 %v1349, %v1427
          %v1429 = vpop.f32.mrb[0].mxu0
          %1430 = vmatprep.mubr.f32.mxu0 0.0
          %1431 = vmatmul.mubr.f32.gmra.mrb[0].mxu0 %v1136
          %v1432 = vpop.f32.mrb[0].mxu0
          %v1433 = vadd.f32 %v1349, %v1432
          %v1434 = vpop.f32.mrb[0].mxu0
          %1435 = vmatprep.mubr.f32.mxu0 0.0
          %1436 = vmatmul.mubr.f32.gmra.mrb[0].mxu0 %v1139
          %v1437 = vpop.f32.mrb[0].mxu0
          %v1438 = vadd.f32 %v1349, %v1437
          %v1439 = vpop.f32.mrb[0].mxu0
          %1440 = vmatprep.mubr.f32.mxu0 0.0
          %1441 = vmatmul.mubr.f32.gmra.mrb[0].mxu0 %v1142
          %v1442 = vpop.f32.mrb[0].mxu0
          %v1443 = vadd.f32 %v1349, %v1442
          %v1444 = vpop.f32.mrb[0].mxu0
          %1445 = vmatprep.mubr.f32.mxu0 0.0
          %1446 = vmatmul.mubr.f32.gmra.mrb[0].mxu0 %v1145
          %v1447 = vpop.f32.mrb[0].mxu0
          %v1448 = vadd.f32 %v1349, %v1447
          %v1449 = vpop.f32.mrb[0].mxu0
          %1450 = vmatprep.mubr.f32.mxu0 0.0
          %1451 = vmatmul.mubr.f32.gmra.mrb[0].mxu0 %v1148
          %v1452 = vpop.f32.mrb[0].mxu0
          %v1453 = vadd.f32 %v1349, %v1452
          %v1454 = vpop.f32.mrb[0].mxu0
          %1455 = vmatprep.mubr.f32.mxu0 0.0
          %1456 = vmatmul.mubr.f32.gmra.mrb[0].mxu0 %v1151
          %v1457 = vpop.f32.mrb[0].mxu0
          %v1458 = vadd.f32 %v1349, %v1457
          %v1459 = vpop.f32.mrb[0].mxu0
          %1460 = vmatprep.mubr.f32.mxu0 0.0
          %1461 = vmatmul.mubr.f32.gmra.mrb[0].mxu0 %v1154
          %v1462 = vpop.f32.mrb[0].mxu0
          %v1463 = vadd.f32 %v1349, %v1462
          %v1464 = vpop.f32.mrb[0].mxu0
          %1465 = vmatprep.mubr.f32.mxu0 0.0
          %1466 = vmatmul.mubr.f32.gmra.mrb[0].mxu0 %v1157
          %v1467 = vpop.f32.mrb[0].mxu0
          %v1468 = vadd.f32 %v1349, %v1467
          %v1469 = vpop.f32.mrb[0].mxu0
          %1470 = vmatprep.mubr.f32.mxu0 0.0
          %1471 = vmatmul.mubr.f32.gmra.mrb[0].mxu0 %v1160
          %v1472 = vpop.f32.mrb[0].mxu0
          %v1473 = vadd.f32 %v1349, %v1472
          %v1474 = vpop.f32.mrb[0].mxu0
          %1475 = vmatprep.mubr.f32.mxu0 0.0
          %1476 = vmatmul.mubr.f32.gmra.mrb[0].mxu0 %v1163
          %v1477 = vpop.f32.mrb[0].mxu0
          %v1478 = vadd.f32 %v1349, %v1477
          %v1479 = vpop.f32.mrb[0].mxu0
          %1480 = vmatprep.mubr.f32.mxu0 0.0
          %1481 = vmatmul.mubr.f32.gmra.mrb[0].mxu0 %v1166
          %v1482 = vpop.f32.mrb[0].mxu0
          %v1483 = vadd.f32 %v1349, %v1482
          %v1484 = vpop.f32.mrb[0].mxu0
          %1485 = vmatprep.mubr.f32.mxu0 0.0
          %1486 = vmatmul.mubr.f32.gmra.mrb[0].mxu0 %v1169
          %v1487 = vpop.f32.mrb[0].mxu0
          %v1488 = vadd.f32 %v1349, %v1487
          %v1489 = vpop.f32.mrb[0].mxu0
          %1490 = vmatprep.mubr.f32.mxu0 0.0
          %1491 = vmatmul.mubr.f32.gmra.mrb[0].mxu0 %v1172
          %v1492 = vpop.f32.mrb[0].mxu0
          %v1493 = vadd.f32 %v1349, %v1492
          %v1494 = vpop.f32.mrb[0].mxu0
          %1495 = vdwg.mxu0
          %s1496 = scalar_lea.vmem [#allocation3], %s440
          %1497 = vst [vmem:[%s1496] sm:$0xff] %v1418
          %1498 = vst [vmem:[%s1496 + $0x8] sm:$0xff] %v1423
          %1499 = vst [vmem:[%s1496 + $0x10] sm:$0xff] %v1428
          %1500 = vst [vmem:[%s1496 + $0x18] sm:$0xff] %v1433
          %1501 = vst [vmem:[%s1496 + $0x20] sm:$0xff] %v1438
          %1502 = vst [vmem:[%s1496 + $0x28] sm:$0xff] %v1443
          %1503 = vst [vmem:[%s1496 + $0x30] sm:$0xff] %v1448
          %1504 = vst [vmem:[%s1496 + $0x38] sm:$0xff] %v1453
          %1505 = vst [vmem:[%s1496 + $0x40] sm:$0xff] %v1458
          %1506 = vst [vmem:[%s1496 + $0x48] sm:$0xff] %v1463
          %1507 = vst [vmem:[%s1496 + $0x50] sm:$0xff] %v1468
          %1508 = vst [vmem:[%s1496 + $0x58] sm:$0xff] %v1473
          %1509 = vst [vmem:[%s1496 + $0x60] sm:$0xff] %v1478
          %1510 = vst [vmem:[%s1496 + $0x68] sm:$0xff] %v1483
          %1511 = vst [vmem:[%s1496 + $0x70] sm:$0xff] %v1488
          %1512 = vst [vmem:[%s1496 + $0x78] sm:$0xff] %v1493
        $region88: #{tpu_custom_call.1} parent=51 // pred_fallthru
          _
        %p1513 = scmp.eq.s32.totalorder %s33, 1
        // Predicated region
        $region89: #{tpu_custom_call.1} parent=51 // pred_check
          %p1514 = pneg %p1513
        $region90: #{tpu_custom_call.1} parent=51 // pred_check_branch
          %1516 = sbr.rel (%p1514) target = $region92
        $region91: #{tpu_custom_call.1} parent=51 // pred_region
          %v1517 = vld [vmem:[%s376] sm:$0xff]
          %v1518 = vld [vmem:[%s376 + $0x8] sm:$0xff]
          %v1519 = vld [vmem:[%s376 + $0x10] sm:$0xff]
          %v1520 = vld [vmem:[%s376 + $0x18] sm:$0xff]
          %v1521 = vld [vmem:[%s376 + $0x20] sm:$0xff]
          %v1522 = vld [vmem:[%s376 + $0x28] sm:$0xff]
          %v1523 = vld [vmem:[%s376 + $0x30] sm:$0xff]
          %v1524 = vld [vmem:[%s376 + $0x38] sm:$0xff]
          %v1525 = vld [vmem:[%s376 + $0x40] sm:$0xff]
          %v1526 = vld [vmem:[%s376 + $0x48] sm:$0xff]
          %v1527 = vld [vmem:[%s376 + $0x50] sm:$0xff]
          %v1528 = vld [vmem:[%s376 + $0x58] sm:$0xff]
          %v1529 = vld [vmem:[%s376 + $0x60] sm:$0xff]
          %v1530 = vld [vmem:[%s376 + $0x68] sm:$0xff]
          %v1531 = vld [vmem:[%s376 + $0x70] sm:$0xff]
          %v1532 = vld [vmem:[%s376 + $0x78] sm:$0xff]
          %v1533 = vunpack.c.l.bf16 %v1517
          %v1534 = vunpack.c.h.bf16 %v1517
          %v1535 = vunpack.c.l.bf16 %v1518
          %v1536 = vunpack.c.h.bf16 %v1518
          %v1537 = vunpack.c.l.bf16 %v1519
          %v1538 = vunpack.c.h.bf16 %v1519
          %v1539 = vunpack.c.l.bf16 %v1520
          %v1540 = vunpack.c.h.bf16 %v1520
          %v1541 = vunpack.c.l.bf16 %v1521
          %v1542 = vunpack.c.h.bf16 %v1521
          %v1543 = vunpack.c.l.bf16 %v1522
          %v1544 = vunpack.c.h.bf16 %v1522
          %v1545 = vunpack.c.l.bf16 %v1523
          %v1546 = vunpack.c.h.bf16 %v1523
          %v1547 = vunpack.c.l.bf16 %v1524
          %v1548 = vunpack.c.h.bf16 %v1524
          %v1549 = vunpack.c.l.bf16 %v1525
          %v1550 = vunpack.c.h.bf16 %v1525
          %v1551 = vunpack.c.l.bf16 %v1526
          %v1552 = vunpack.c.h.bf16 %v1526
          %v1553 = vunpack.c.l.bf16 %v1527
          %v1554 = vunpack.c.h.bf16 %v1527
          %v1555 = vunpack.c.l.bf16 %v1528
          %v1556 = vunpack.c.h.bf16 %v1528
          %v1557 = vunpack.c.l.bf16 %v1529
          %v1558 = vunpack.c.h.bf16 %v1529
          %v1559 = vunpack.c.l.bf16 %v1530
          %v1560 = vunpack.c.h.bf16 %v1530
          %v1561 = vunpack.c.l.bf16 %v1531
          %v1562 = vunpack.c.h.bf16 %v1531
          %v1563 = vunpack.c.l.bf16 %v1532
          %v1564 = vunpack.c.h.bf16 %v1532
          %v1565 = vld [vmem:[#allocation2] sm:$0xff]
          %v1566 = vld [vmem:[#allocation2 + $0x8] sm:$0xff]
          %v1567 = vld [vmem:[#allocation2 + $0x10] sm:$0xff]
          %v1568 = vld [vmem:[#allocation2 + $0x18] sm:$0xff]
          %v1569 = vld [vmem:[#allocation2 + $0x20] sm:$0xff]
          %v1570 = vld [vmem:[#allocation2 + $0x28] sm:$0xff]
          %v1571 = vld [vmem:[#allocation2 + $0x30] sm:$0xff]
          %v1572 = vld [vmem:[#allocation2 + $0x38] sm:$0xff]
          %v1573 = vld [vmem:[#allocation2 + $0x40] sm:$0xff]
          %v1574 = vld [vmem:[#allocation2 + $0x48] sm:$0xff]
          %v1575 = vld [vmem:[#allocation2 + $0x50] sm:$0xff]
          %v1576 = vld [vmem:[#allocation2 + $0x58] sm:$0xff]
          %v1577 = vld [vmem:[#allocation2 + $0x60] sm:$0xff]
          %v1578 = vld [vmem:[#allocation2 + $0x68] sm:$0xff]
          %v1579 = vld [vmem:[#allocation2 + $0x70] sm:$0xff]
          %v1580 = vld [vmem:[#allocation2 + $0x78] sm:$0xff]
          %v1581 = vld [vmem:[#allocation2 + $0x80] sm:$0xff]
          %v1582 = vld [vmem:[#allocation2 + $0x88] sm:$0xff]
          %v1583 = vld [vmem:[#allocation2 + $0x90] sm:$0xff]
          %v1584 = vld [vmem:[#allocation2 + $0x98] sm:$0xff]
          %v1585 = vld [vmem:[#allocation2 + $0xa0] sm:$0xff]
          %v1586 = vld [vmem:[#allocation2 + $0xa8] sm:$0xff]
          %v1587 = vld [vmem:[#allocation2 + $0xb0] sm:$0xff]
          %v1588 = vld [vmem:[#allocation2 + $0xb8] sm:$0xff]
          %v1589 = vld [vmem:[#allocation2 + $0xc0] sm:$0xff]
          %v1590 = vld [vmem:[#allocation2 + $0xc8] sm:$0xff]
          %v1591 = vld [vmem:[#allocation2 + $0xd0] sm:$0xff]
          %v1592 = vld [vmem:[#allocation2 + $0xd8] sm:$0xff]
          %v1593 = vld [vmem:[#allocation2 + $0xe0] sm:$0xff]
          %v1594 = vld [vmem:[#allocation2 + $0xe8] sm:$0xff]
          %v1595 = vld [vmem:[#allocation2 + $0xf0] sm:$0xff]
          %v1596 = vld [vmem:[#allocation2 + $0xf8] sm:$0xff]
          %s1597 = scalar_lea.vmem [#allocation3], %s440
          %v1598 = vld [vmem:[%s1597] sm:$0xff]
          %v1599 = vld [vmem:[%s1597 + $0x8] sm:$0xff]
          %v1600 = vld [vmem:[%s1597 + $0x10] sm:$0xff]
          %v1601 = vld [vmem:[%s1597 + $0x18] sm:$0xff]
          %v1602 = vld [vmem:[%s1597 + $0x20] sm:$0xff]
          %v1603 = vld [vmem:[%s1597 + $0x28] sm:$0xff]
          %v1604 = vld [vmem:[%s1597 + $0x30] sm:$0xff]
          %v1605 = vld [vmem:[%s1597 + $0x38] sm:$0xff]
          %v1606 = vld [vmem:[%s1597 + $0x40] sm:$0xff]
          %v1607 = vld [vmem:[%s1597 + $0x48] sm:$0xff]
          %v1608 = vld [vmem:[%s1597 + $0x50] sm:$0xff]
          %v1609 = vld [vmem:[%s1597 + $0x58] sm:$0xff]
          %v1610 = vld [vmem:[%s1597 + $0x60] sm:$0xff]
          %v1611 = vld [vmem:[%s1597 + $0x68] sm:$0xff]
          %v1612 = vld [vmem:[%s1597 + $0x70] sm:$0xff]
          %v1613 = vld [vmem:[%s1597 + $0x78] sm:$0xff]
          %1614 = vmatprep.subr.mxu0 0.0
          %1615 = vmatpush1.msra.mxu0 %v1565
          %1616 = vmatprep.subr.mxu0 0.0
          %1617 = vmatpush1.msra.mxu0 %v1566
          %1618 = vmatprep.subr.mxu0 0.0
          %1619 = vmatpush1.msra.mxu0 %v1567
          %1620 = vmatprep.subr.mxu0 0.0
          %1621 = vmatpush1.msra.mxu0 %v1568
          %1622 = vmatprep.subr.mxu0 0.0
          %1623 = vmatpush1.msra.mxu0 %v1569
          %1624 = vmatprep.subr.mxu0 0.0
          %1625 = vmatpush1.msra.mxu0 %v1570
          %1626 = vmatprep.subr.mxu0 0.0
          %1627 = vmatpush1.msra.mxu0 %v1571
          %1628 = vmatprep.subr.mxu0 0.0
          %1629 = vmatpush1.msra.mxu0 %v1572
          %1630 = vmatprep.subr.mxu0 0.0
          %1631 = vmatpush1.msra.mxu0 %v1573
          %1632 = vmatprep.subr.mxu0 0.0
          %1633 = vmatpush1.msra.mxu0 %v1574
          %1634 = vmatprep.subr.mxu0 0.0
          %1635 = vmatpush1.msra.mxu0 %v1575
          %1636 = vmatprep.subr.mxu0 0.0
          %1637 = vmatpush1.msra.mxu0 %v1576
          %1638 = vmatprep.subr.mxu0 0.0
          %1639 = vmatpush1.msra.mxu0 %v1577
          %1640 = vmatprep.subr.mxu0 0.0
          %1641 = vmatpush1.msra.mxu0 %v1578
          %1642 = vmatprep.subr.mxu0 0.0
          %1643 = vmatpush1.msra.mxu0 %v1579
          %1644 = vmatprep.subr.mxu0 0.0
          %1645 = vmatpush1.msra.mxu0 %v1580
          %1646 = vmatprep.subr.mxu0 0.0
          %1647 = vmatpush1.msra.mxu0 %v1581
          %1648 = vmatprep.subr.mxu0 0.0
          %1649 = vmatpush1.msra.mxu0 %v1582
          %1650 = vmatprep.subr.mxu0 0.0
          %1651 = vmatpush1.msra.mxu0 %v1583
          %1652 = vmatprep.subr.mxu0 0.0
          %1653 = vmatpush1.msra.mxu0 %v1584
          %1654 = vmatprep.subr.mxu0 0.0
          %1655 = vmatpush1.msra.mxu0 %v1585
          %1656 = vmatprep.subr.mxu0 0.0
          %1657 = vmatpush1.msra.mxu0 %v1586
          %1658 = vmatprep.subr.mxu0 0.0
          %1659 = vmatpush1.msra.mxu0 %v1587
          %1660 = vmatprep.subr.mxu0 0.0
          %1661 = vmatpush1.msra.mxu0 %v1588
          %1662 = vmatprep.subr.mxu0 0.0
          %1663 = vmatpush1.msra.mxu0 %v1589
          %1664 = vmatprep.subr.mxu0 0.0
          %1665 = vmatpush1.msra.mxu0 %v1590
          %1666 = vmatprep.subr.mxu0 0.0
          %1667 = vmatpush1.msra.mxu0 %v1591
          %1668 = vmatprep.subr.mxu0 0.0
          %1669 = vmatpush1.msra.mxu0 %v1592
          %1670 = vmatprep.subr.mxu0 0.0
          %1671 = vmatpush1.msra.mxu0 %v1593
          %1672 = vmatprep.subr.mxu0 0.0
          %1673 = vmatpush1.msra.mxu0 %v1594
          %1674 = vmatprep.subr.mxu0 0.0
          %1675 = vmatpush1.msra.mxu0 %v1595
          %1676 = vmatprep.subr.mxu0 0.0
          %1677 = vmatpush1.msra.mxu0 %v1596
          %1678 = vmatprep.mubr.f32.mxu0 %v1534
          %1679 = vmatmul.mubr.f32.gmra.mrb[0].mxu0 %v1533
          %v1680 = vpop.f32.mrb[0].mxu0
          %v1681 = vadd.f32 %v1598, %v1680
          %v1682 = vpop.f32.mrb[0].mxu0
          %1683 = vmatprep.mubr.f32.mxu0 %v1536
          %1684 = vmatmul.mubr.f32.gmra.mrb[0].mxu0 %v1535
          %v1685 = vpop.f32.mrb[0].mxu0
          %v1686 = vadd.f32 %v1599, %v1685
          %v1687 = vpop.f32.mrb[0].mxu0
          %1688 = vmatprep.mubr.f32.mxu0 %v1538
          %1689 = vmatmul.mubr.f32.gmra.mrb[0].mxu0 %v1537
          %v1690 = vpop.f32.mrb[0].mxu0
          %v1691 = vadd.f32 %v1600, %v1690
          %v1692 = vpop.f32.mrb[0].mxu0
          %1693 = vmatprep.mubr.f32.mxu0 %v1540
          %1694 = vmatmul.mubr.f32.gmra.mrb[0].mxu0 %v1539
          %v1695 = vpop.f32.mrb[0].mxu0
          %v1696 = vadd.f32 %v1601, %v1695
          %v1697 = vpop.f32.mrb[0].mxu0
          %1698 = vmatprep.mubr.f32.mxu0 %v1542
          %1699 = vmatmul.mubr.f32.gmra.mrb[0].mxu0 %v1541
          %v1700 = vpop.f32.mrb[0].mxu0
          %v1701 = vadd.f32 %v1602, %v1700
          %v1702 = vpop.f32.mrb[0].mxu0
          %1703 = vmatprep.mubr.f32.mxu0 %v1544
          %1704 = vmatmul.mubr.f32.gmra.mrb[0].mxu0 %v1543
          %v1705 = vpop.f32.mrb[0].mxu0
          %v1706 = vadd.f32 %v1603, %v1705
          %v1707 = vpop.f32.mrb[0].mxu0
          %1708 = vmatprep.mubr.f32.mxu0 %v1546
          %1709 = vmatmul.mubr.f32.gmra.mrb[0].mxu0 %v1545
          %v1710 = vpop.f32.mrb[0].mxu0
          %v1711 = vadd.f32 %v1604, %v1710
          %v1712 = vpop.f32.mrb[0].mxu0
          %1713 = vmatprep.mubr.f32.mxu0 %v1548
          %1714 = vmatmul.mubr.f32.gmra.mrb[0].mxu0 %v1547
          %v1715 = vpop.f32.mrb[0].mxu0
          %v1716 = vadd.f32 %v1605, %v1715
          %v1717 = vpop.f32.mrb[0].mxu0
          %1718 = vmatprep.mubr.f32.mxu0 %v1550
          %1719 = vmatmul.mubr.f32.gmra.mrb[0].mxu0 %v1549
          %v1720 = vpop.f32.mrb[0].mxu0
          %v1721 = vadd.f32 %v1606, %v1720
          %v1722 = vpop.f32.mrb[0].mxu0
          %1723 = vmatprep.mubr.f32.mxu0 %v1552
          %1724 = vmatmul.mubr.f32.gmra.mrb[0].mxu0 %v1551
          %v1725 = vpop.f32.mrb[0].mxu0
          %v1726 = vadd.f32 %v1607, %v1725
          %v1727 = vpop.f32.mrb[0].mxu0
          %1728 = vmatprep.mubr.f32.mxu0 %v1554
          %1729 = vmatmul.mubr.f32.gmra.mrb[0].mxu0 %v1553
          %v1730 = vpop.f32.mrb[0].mxu0
          %v1731 = vadd.f32 %v1608, %v1730
          %v1732 = vpop.f32.mrb[0].mxu0
          %1733 = vmatprep.mubr.f32.mxu0 %v1556
          %1734 = vmatmul.mubr.f32.gmra.mrb[0].mxu0 %v1555
          %v1735 = vpop.f32.mrb[0].mxu0
          %v1736 = vadd.f32 %v1609, %v1735
          %v1737 = vpop.f32.mrb[0].mxu0
          %1738 = vmatprep.mubr.f32.mxu0 %v1558
          %1739 = vmatmul.mubr.f32.gmra.mrb[0].mxu0 %v1557
          %v1740 = vpop.f32.mrb[0].mxu0
          %v1741 = vadd.f32 %v1610, %v1740
          %v1742 = vpop.f32.mrb[0].mxu0
          %1743 = vmatprep.mubr.f32.mxu0 %v1560
          %1744 = vmatmul.mubr.f32.gmra.mrb[0].mxu0 %v1559
          %v1745 = vpop.f32.mrb[0].mxu0
          %v1746 = vadd.f32 %v1611, %v1745
          %v1747 = vpop.f32.mrb[0].mxu0
          %1748 = vmatprep.mubr.f32.mxu0 %v1562
          %1749 = vmatmul.mubr.f32.gmra.mrb[0].mxu0 %v1561
          %v1750 = vpop.f32.mrb[0].mxu0
          %v1751 = vadd.f32 %v1612, %v1750
          %v1752 = vpop.f32.mrb[0].mxu0
          %1753 = vmatprep.mubr.f32.mxu0 %v1564
          %1754 = vmatmul.mubr.f32.gmra.mrb[0].mxu0 %v1563
          %v1755 = vpop.f32.mrb[0].mxu0
          %v1756 = vadd.f32 %v1613, %v1755
          %v1757 = vpop.f32.mrb[0].mxu0
          %1758 = vdwg.mxu0
          %1759 = vst [vmem:[%s436] sm:$0xff] %v1681
          %1760 = vst [vmem:[%s436 + $0x8] sm:$0xff] %v1686
          %1761 = vst [vmem:[%s436 + $0x10] sm:$0xff] %v1691
          %1762 = vst [vmem:[%s436 + $0x18] sm:$0xff] %v1696
          %1763 = vst [vmem:[%s436 + $0x20] sm:$0xff] %v1701
          %1764 = vst [vmem:[%s436 + $0x28] sm:$0xff] %v1706
          %1765 = vst [vmem:[%s436 + $0x30] sm:$0xff] %v1711
          %1766 = vst [vmem:[%s436 + $0x38] sm:$0xff] %v1716
          %1767 = vst [vmem:[%s436 + $0x40] sm:$0xff] %v1721
          %1768 = vst [vmem:[%s436 + $0x48] sm:$0xff] %v1726
          %1769 = vst [vmem:[%s436 + $0x50] sm:$0xff] %v1731
          %1770 = vst [vmem:[%s436 + $0x58] sm:$0xff] %v1736
          %1771 = vst [vmem:[%s436 + $0x60] sm:$0xff] %v1741
          %1772 = vst [vmem:[%s436 + $0x68] sm:$0xff] %v1746
          %1773 = vst [vmem:[%s436 + $0x70] sm:$0xff] %v1751
          %1774 = vst [vmem:[%s436 + $0x78] sm:$0xff] %v1756
        $region92: #{tpu_custom_call.1} parent=51 // pred_fallthru
          _
        %s1775 = sand.u32 %s224, 1
        %s1776 = scalar_lea.sflag [#allocation6], %s1775
        %s1777 = sand.u32 %s224, 1
        %s1778 = smul.addr %s1777, 128
        %s1779 = scalar_lea.vmem [#allocation18], %s1778
        // Predicated region
        $region93: #{tpu_custom_call.1} parent=51 // pred_check
          %p1780 = pneg %p234
        $region94: #{tpu_custom_call.1} parent=51 // pred_check_branch
          %1782 = sbr.rel (%p1780) target = $region96
        $region95: #{tpu_custom_call.1} parent=51 // pred_region
          %s1783 = smul.u32 %s33, %s34
          %s1784 = smul.u32 16, %s1783
          %s1786 = ssub.s32 2048, 2048
          %1787 = vsyncadd %s1776, %s1786
          %s1788 = smul.addr %s1784, 128
          %s1789 = scalar_lea.hbm %s8, %s1788
          %s1790 = sshll.u32 %s1779, 4
          %s1791 = int_to_ptr.vmem [resolvable:$true] %s1790
          %1796 = dma.vmem_to_hbm [thread:$0]  %s1791, 2048, %s1789, %s1776, 128, 128, 8
        $region96: #{tpu_custom_call.1} parent=51 // pred_fallthru
          _
      $region52: #{tpu_custom_call.1} parent=5 // pred_fallthru
        _
      %p1797 = scmp.le.s32.totalorder 2, %s24
      // Predicated region
      $region97: #{tpu_custom_call.1} parent=5 // pred_check
        %p1798 = pneg %p1797
      $region98: #{tpu_custom_call.1} parent=5 // pred_check_branch
        %1800 = sbr.rel (%p1798) target = $region100
      $region99: #{tpu_custom_call.1} parent=5 // pred_region
        %s1801 = ssub.s32 %s24, 2
        // Predicated region
        $region101: #{tpu_custom_call.1} parent=99 // pred_check
          %p1802 = pneg %p240
        $region102: #{tpu_custom_call.1} parent=99 // pred_check_branch
          %1804 = sbr.rel (%p1802) target = $region104
        $region103: #{tpu_custom_call.1} parent=99 // pred_region
          %s1805 = sand.u32 %s225, 1
          %s1806 = scalar_lea.sflag [#allocation6], %s1805
          %s1807 = sand.u32 %s225, 1
          %s1808 = smul.addr %s1807, 128
          %s1809 = scalar_lea.vmem [#allocation18], %s1808
          %1810 = dma.done %s1806, 2048
        $region104: #{tpu_custom_call.1} parent=99 // pred_fallthru
          _
      $region100: #{tpu_custom_call.1} parent=5 // pred_fallthru
        _
    $region6: #{tpu_custom_call.1} parent=1 // loop_footer
      %s28 = sadd.s32 1, %s24
    $region7: #{tpu_custom_call.1} parent=1 // loop_footer_branch
      %23 = sbr.rel target = $region3
    $region8: #{tpu_custom_call.1} parent=1 // loop_exit
      _
    %1811 = vsyncpa [#allocation5], 1
    %s1812 = scalar_lea.sflag [#allocation5], 1
    %1813 = vsyncpa %s1812, 1
    %1814 = vsyncpa [#allocation8], 1
    %1815 = vsyncpa [#allocation11], 1
    %1816 = vsyncpa [#allocation14], 1
    %1817 = vsyncpa [#allocation17], 1
    %1818 = vsyncpa [#allocation6], 1
    %s1819 = scalar_lea.sflag [#allocation6], 1
    %1820 = vsyncpa %s1819, 1

</llo_original>
